<compile_context>
chip_gen: v7x
topology: tpu7x:2x2x1
jax: 0.10.0
libtpu: 0.0.40
codegen_flags: <defaults>
</compile_context>

<pallas_src>
import jax
import jax.numpy as jnp
from jax.experimental import pallas as pl
from jax.experimental.pallas import tpu as pltpu

ROBOT_SELF_DIM = 9
OTHER_DIM = 7                                # input_dim - robot_self_dim
INPUT_DIM = ROBOT_SELF_DIM + OTHER_DIM       # 16
HIDDEN = 32                                  # lstm_hidden_dim
GATES = 4 * HIDDEN                           # 128 fused gate lanes, order i, f, g, o
MLP_DIMS = (64, 32, 1)
ROBOT_NUM = 3
OBSTACLE_NUM = 3                             # obstacle-LSTM sequence length
N_SEQ = 3                                    # obstacle sequences: self / adj1 / adj2
NUM_ROWS = (ROBOT_NUM - 1) + N_SEQ * OBSTACLE_NUM   # 11
MATMUL_DTYPE = jnp.bfloat16

# sigmoid(x) = 0.5 * (1 + tanh(x / 2)): fold the 0.5 pre-scale of the i/f/o gates into the
# packed weights & biases so the kernel runs ONE full-width tanh per cell update.
GATE_PRESCALE = (0.5, 0.5, 1.0, 0.5)

# Row permutation applied in the wrapper:
#   [robot row 0, robot row 1,
#    obstacle t=0 (self, adj1, adj2), t=1 (self, adj1, adj2), t=2 (self, adj1, adj2)]
ROW_PERM = (0, 1, 2, 5, 8, 3, 6, 9, 4, 7, 10)


def _round_up(x, m):
    return -(-x // m) * m


def _lstm_gates(z, c):
    """Fused-gate LSTM cell update.

    z: (M, 4H) pre-activations; the 0.5 pre-scale for the sigmoid gates (i, f, o) is
    already folded into the weights, so sigmoid(x) == 0.5 * (1 + tanh-slice)."""
    H = HIDDEN
    t = jnp.tanh(z)                               # ONE full-128-lane EUP op for all gates
    i = 0.5 * (t[:, 0 * H:1 * H] + 1.0)
    f = 0.5 * (t[:, 1 * H:2 * H] + 1.0)
    g = t[:, 2 * H:3 * H]
    o = 0.5 * (t[:, 3 * H:4 * H] + 1.0)
    c_new = f * c + i * g
    h_new = o * jnp.tanh(c_new)
    return h_new, c_new


def value_network_kernel(
    state_ref,
    wih_o_ref, whh_o_ref, b_o_ref,
    wih_f16_ref, wih_fh_ref, whh_f_ref, b_f_ref,
    w1a16_ref, w1b_ref, w1c_ref, b1_ref, w2_ref, b2_ref, w3_ref, b3_ref,
    out_ref,
):
    TB = state_ref.shape[1]                       # batch tile (multiple of 16)
    H = HIDDEN
    NR = N_SEQ * OBSTACLE_NUM                     # 9 obstacle rows

    # ---- batched obstacle LSTM (3 sequences x 3 steps) -------------------------------
    # Rows 2:11 of the (permuted) state are timestep-major, sequence-minor; loading the
    # whole slab and collapsing the leading dims gives one (9*TB, 16) dense-sublane
    # operand.  Input-path pre-activations hoisted: one long bf16 MXU matmul.
    x_obst = state_ref[pl.ds(2, NR), :, :].reshape(NR * TB, INPUT_DIM)     # bf16
    zx = jnp.dot(x_obst, wih_o_ref[...],
                 preferred_element_type=jnp.float32) + b_o_ref[...]        # (9TB, 128) f32
    whh_o = whh_o_ref[...]

    h = None
    c = jnp.zeros((N_SEQ * TB, H), jnp.float32)
    for t in range(OBSTACLE_NUM):                 # 3 steps, statically unrolled
        z = zx[t * N_SEQ * TB:(t + 1) * N_SEQ * TB]                        # (3TB, 128)
        if h is not None:                         # h0 == 0: skip recurrent matmul at t==0
            z = z + jnp.dot(h.astype(MATMUL_DTYPE), whh_o,
                            preferred_element_type=jnp.float32)
        h, c = _lstm_gates(z, c)

    hn1 = h[:TB]                                  # lstm_obstacle(state[:, 2:5, :]) final h
    hadj = h[TB:N_SEQ * TB]                       # [adj1 (rows 5:8); adj2 (rows 8:11)]

    # ---- formation LSTM over the 2-step sequence --------------------------------------
    #   step 0: concat(state[:,0,9:], hn1_adj1); step 1: concat(state[:,1,9:], hn1_adj2)
    # The 7-wide part uses a (16,128) weight with rows 0:9 zero so the full 16-wide state
    # row can be fed directly.  Both steps' input matmuls hoisted into one.
    x01 = state_ref[pl.ds(0, 2), :, :].reshape(2 * TB, INPUT_DIM)          # rows 0,1, bf16
    zf = (jnp.dot(x01, wih_f16_ref[...], preferred_element_type=jnp.float32)
          + jnp.dot(hadj.astype(MATMUL_DTYPE), wih_fh_ref[...],
                    preferred_element_type=jnp.float32)
          + b_f_ref[...])                                                  # (2TB, 128)
    whh_f = whh_f_ref[...]
    hf, cf = _lstm_gates(zf[:TB], jnp.zeros((TB, H), jnp.float32))
    z_step1 = zf[TB:] + jnp.dot(hf.astype(MATMUL_DTYPE), whh_f,
                                preferred_element_type=jnp.float32)
    hn2_s, _ = _lstm_gates(z_step1, cf)

    # ---- MLP on concat([robots_state, hn2_s, hn1]) : 73 -> 64 -> 32 -> 1 ---------------
    # First Linear split into three row blocks; the 9-wide robots_state part uses the full
    # 16-wide row against a weight whose rows 9:16 are zero.
    row0 = x01[:TB]
    z1 = (jnp.dot(row0, w1a16_ref[...], preferred_element_type=jnp.float32)
          + jnp.dot(hn2_s.astype(MATMUL_DTYPE), w1b_ref[...],
                    preferred_element_type=jnp.float32)
          + jnp.dot(hn1.astype(MATMUL_DTYPE), w1c_ref[...],
                    preferred_element_type=jnp.float32)
          + b1_ref[...])
    z1 = jnp.maximum(z1, 0.0)                                              # ReLU
    z2 = jnp.dot(z1.astype(MATMUL_DTYPE), w2_ref[...],
                 preferred_element_type=jnp.float32) + b2_ref[...]
    z2 = jnp.maximum(z2, 0.0)                                              # ReLU
    # final (32 -> 1) layer as VPU multiply + lane reduction (avoids N=1 MXU matmul)
    out = jnp.sum(z2 * w3_ref[...], axis=-1, keepdims=True) + b3_ref[...]
    out_ref[...] = out                                                     # (TB, 1), no ReLU


# ---------------------------------------------------------------------------------------
# Parameter handling: original PyTorch layout (for the reference) + packed kernel layout.
# ---------------------------------------------------------------------------------------
def init_torch_params(key):
    """Deterministic synthetic parameters in the ORIGINAL PyTorch layouts
    (nn.LSTM: weight_ih (4H,in), weight_hh (4H,H), biases (4H,), gate order i,f,g,o;
     nn.Linear: weight (out,in), bias (out,))."""
    ks = jax.random.split(key, 14)
    H = HIDDEN

    def u(k, shape, fan):
        s = 1.0 / jnp.sqrt(jnp.float32(fan))
        return jax.random.uniform(k, shape, jnp.float32, -s, s)

    obstacle = (u(ks[0], (4 * H, INPUT_DIM), H), u(ks[1], (4 * H, H), H),
                u(ks[2], (4 * H,), H), u(ks[3], (4 * H,), H))
    formation = (u(ks[4], (4 * H, OTHER_DIM + H), H), u(ks[5], (4 * H, H), H),
                 u(ks[6], (4 * H,), H), u(ks[7], (4 * H,), H))
    in0 = ROBOT_SELF_DIM + 2 * H                                           # 73
    mlp = (u(ks[8], (MLP_DIMS[0], in0), in0), u(ks[9], (MLP_DIMS[0],), in0),
           u(ks[10], (MLP_DIMS[1], MLP_DIMS[0]), MLP_DIMS[0]), u(ks[11], (MLP_DIMS[1],), MLP_DIMS[0]),
           u(ks[12], (MLP_DIMS[2], MLP_DIMS[1]), MLP_DIMS[1]), u(ks[13], (MLP_DIMS[2],), MLP_DIMS[1]))
    return {"obstacle": obstacle, "formation": formation, "mlp": mlp}


def pack_params(tp, dtype=MATMUL_DTYPE):
    """Restack PyTorch-layout params into fused-gate, lane-dense, bf16 kernel layouts."""
    H = HIDDEN

    def fuse(w):                                   # (4H, in) -> (in, 4H), gate-prescaled
        return jnp.concatenate(
            [w[g * H:(g + 1) * H, :].T * GATE_PRESCALE[g] for g in range(4)], axis=1)

    def fuse_b(b_ih, b_hh):
        b = b_ih + b_hh
        return jnp.concatenate(
            [b[g * H:(g + 1) * H] * GATE_PRESCALE[g] for g in range(4)]).reshape(1, GATES)

    w_ih_o, w_hh_o, b_ih_o, b_hh_o = tp["obstacle"]
    wih_o = fuse(w_ih_o).astype(dtype)             # (16, 128)
    whh_o = fuse(w_hh_o).astype(dtype)             # (32, 128)
    b_o = fuse_b(b_ih_o, b_hh_o)                   # (1, 128) f32

    w_ih_f, w_hh_f, b_ih_f, b_hh_f = tp["formation"]
    wih_f = fuse(w_ih_f)                           # (39, 128); rows 0:7 -> 7-wide input
    wih_f16 = (jnp.zeros((INPUT_DIM, GATES), jnp.float32)
               .at[ROBOT_SELF_DIM:].set(wih_f[:OTHER_DIM])).astype(dtype)  # (16, 128)
    wih_fh = wih_f[OTHER_DIM:].astype(dtype)       # (32, 128)
    whh_f = fuse(w_hh_f).astype(dtype)             # (32, 128)
    b_f = fuse_b(b_ih_f, b_hh_f)                   # (1, 128) f32

    w1, b1, w2, b2, w3, b3 = tp["mlp"]
    w1t = w1.T                                     # (73, 64)
    w1a16 = (jnp.zeros((INPUT_DIM, MLP_DIMS[0]), jnp.float32)
             .at[:ROBOT_SELF_DIM].set(w1t[:ROBOT_SELF_DIM])).astype(dtype) # (16, 64)
    w1b = w1t[ROBOT_SELF_DIM:ROBOT_SELF_DIM + H].astype(dtype)             # (32, 64)
    w1c = w1t[ROBOT_SELF_DIM + H:].astype(dtype)                           # (32, 64)
    b1p = b1.reshape(1, -1)                                                # (1, 64) f32
    w2p = w2.T.astype(dtype)                                               # (64, 32)
    b2p = b2.reshape(1, -1)                                                # (1, 32) f32
    w3p = w3.reshape(1, -1)                                                # (1, 32) f32 (VPU mul)
    b3p = b3.reshape(1, 1)                                                 # (1, 1)  f32
    return (wih_o, whh_o, b_o, wih_f16, wih_fh, whh_f, b_f,
            w1a16, w1b, w1c, b1p, w2p, b2p, w3p, b3p)


# ---------------------------------------------------------------------------------------
# Wrapper
# ---------------------------------------------------------------------------------------
def value_network_forward(state, params, tile_b=512):
    """state: (B, NUM_ROWS, INPUT_DIM) float32 -> value (B, 1) float32."""
    if state.ndim == 2:
        state = state[None]
    B = state.shape[0]

    # batch tile: multiple of 16 (bf16 sublane packing), >= 2 grid steps when B is large
    # so both v7x TensorCores get work (v5e/v6e are single-TC and just take the big tile).
    tb = min(tile_b, _round_up(B, 16))
    tb = _round_up(tb, 16)
    if B > 16:
        nsteps = max(2, -(-B // tb))
        tb = _round_up(-(-B // nsteps), 16)
    Bp = _round_up(B, tb)

    # rows -> obstacle-timestep-major order; batch to the sublane axis; bf16 matmul operands
    st = jnp.take(state, jnp.asarray(ROW_PERM), axis=1)          # (B, 11, 16)
    st = jnp.transpose(st, (1, 0, 2)).astype(MATMUL_DTYPE)       # (11, B, 16)
    if Bp != B:
        st = jnp.pad(st, ((0, 0), (0, Bp - B), (0, 0)))

    # weights: full-array blocks with constant index_map -> VMEM-resident across the grid
    weight_specs = [pl.BlockSpec(p.shape, lambda i: (0, 0)) for p in params]

    out = pl.pallas_call(
        value_network_kernel,
        out_shape=jax.ShapeDtypeStruct((Bp, MLP_DIMS[-1]), jnp.float32),
        grid=(Bp // tb,),
        in_specs=[pl.BlockSpec((NUM_ROWS, tb, INPUT_DIM), lambda i: (0, i, 0))] + weight_specs,
        out_specs=pl.BlockSpec((tb, MLP_DIMS[-1]), lambda i: (i, 0)),
        compiler_params=pltpu.CompilerParams(dimension_semantics=("parallel",)),
    )(st, *params)
    return out[:B]


# ---------------------------------------------------------------------------------------
# Pure-JAX reference using the ORIGINAL PyTorch layouts (validates the fused restacking).
# ---------------------------------------------------------------------------------------
def _lstm_ref(seq, w_ih, w_hh, b_ih, b_hh):
    B, T, _ = seq.shape
    H = w_hh.shape[1]
    h = jnp.zeros((B, H)); c = jnp.zeros((B, H))
    for t in range(T):
        z = seq[:, t, :] @ w_ih.T + b_ih + h @ w_hh.T + b_hh
        i = jax.nn.sigmoid(z[:, 0 * H:1 * H]); f = jax.nn.sigmoid(z[:, 1 * H:2 * H])
        g = jnp.tanh(z[:, 2 * H:3 * H]);       o = jax.nn.sigmoid(z[:, 3 * H:4 * H])
        c = f * c + i * g
        h = o * jnp.tanh(c)
    return h


def value_network_ref(state, tp):
    robots_state = state[:, 0, :ROBOT_SELF_DIM]
    robots_state_adj1 = state[:, 0, ROBOT_SELF_DIM:]
    robots_state_adj2 = state[:, 1, ROBOT_SELF_DIM:]
    hn1 = _lstm_ref(state[:, 2:5, :], *tp["obstacle"])
    hn1_adj1 = _lstm_ref(state[:, 5:8, :], *tp["obstacle"])
    hn1_adj2 = _lstm_ref(state[:, 8:11, :], *tp["obstacle"])
    swarm = jnp.stack([jnp.concatenate([robots_state_adj1, hn1_adj1], axis=-1),
                       jnp.concatenate([robots_state_adj2, hn1_adj2], axis=-1)], axis=1)
    hn2_s = _lstm_ref(swarm, *tp["formation"])
    x = jnp.concatenate([robots_state, hn2_s, hn1], axis=1)
    w1, b1, w2, b2, w3, b3 = tp["mlp"]
    z1 = jnp.maximum(x @ w1.T + b1, 0.0)
    z2 = jnp.maximum(z1 @ w2.T + b2, 0.0)
    return z2 @ w3.T + b3


if __name__ == "__main__":
    key = jax.random.PRNGKey(0)
    pkey, skey = jax.random.split(key)
    torch_params = init_torch_params(pkey)
    params = pack_params(torch_params)

    B = 2
    state = jax.random.normal(skey, (B, NUM_ROWS, INPUT_DIM), dtype=jnp.float32)

    value = jax.jit(value_network_forward)(state, params)
    value = jax.block_until_ready(value)

    assert value.shape == (B, MLP_DIMS[-1])
    assert bool(jnp.all(jnp.isfinite(value)))

    # f32 reference in the original PyTorch weight layout (kernel uses bf16 matmul
    # operands, hence the looser tolerance).
    ref = value_network_ref(state, torch_params)
    assert bool(jnp.allclose(value, ref, rtol=3e-2, atol=3e-2)), (value, ref)
    print("KERNEL_OK")
</pallas_src>

<mosaic_0001>
module attributes {stable_mosaic.version = 11 : i64} {
  func.func @value_network_kernel(%arg0: i32, %arg1: memref<11x16x16xbf16, #tpu.memory_space<vmem>>, %arg2: memref<16x128xbf16, #tpu.memory_space<vmem>>, %arg3: memref<32x128xbf16, #tpu.memory_space<vmem>>, %arg4: memref<1x128xf32, #tpu.memory_space<vmem>>, %arg5: memref<16x128xbf16, #tpu.memory_space<vmem>>, %arg6: memref<32x128xbf16, #tpu.memory_space<vmem>>, %arg7: memref<32x128xbf16, #tpu.memory_space<vmem>>, %arg8: memref<1x128xf32, #tpu.memory_space<vmem>>, %arg9: memref<16x64xbf16, #tpu.memory_space<vmem>>, %arg10: memref<32x64xbf16, #tpu.memory_space<vmem>>, %arg11: memref<32x64xbf16, #tpu.memory_space<vmem>>, %arg12: memref<1x64xf32, #tpu.memory_space<vmem>>, %arg13: memref<64x32xbf16, #tpu.memory_space<vmem>>, %arg14: memref<1x32xf32, #tpu.memory_space<vmem>>, %arg15: memref<1x32xf32, #tpu.memory_space<vmem>>, %arg16: memref<1x1xf32, #tpu.memory_space<vmem>>, %arg17: memref<16x1xf32, #tpu.memory_space<vmem>>) attributes {dimension_semantics = [#tpu.dimension_semantics<parallel>], iteration_bounds = array<i64: 1>, scalar_prefetch = 0 : i64, scratch_operands = 0 : i64, tpu.core_type = #tpu.core_type<tc>, window_params = [{transform_indices = @transform_0, window_bounds = array<i64: 11, 16, 16>}, {pipeline_mode = #tpu.pipeline_mode<synchronous>, transform_indices = @transform_1, window_bounds = array<i64: 16, 128>}, {pipeline_mode = #tpu.pipeline_mode<synchronous>, transform_indices = @transform_2, window_bounds = array<i64: 32, 128>}, {pipeline_mode = #tpu.pipeline_mode<synchronous>, transform_indices = @transform_3, window_bounds = array<i64: 1, 128>}, {pipeline_mode = #tpu.pipeline_mode<synchronous>, transform_indices = @transform_4, window_bounds = array<i64: 16, 128>}, {pipeline_mode = #tpu.pipeline_mode<synchronous>, transform_indices = @transform_5, window_bounds = array<i64: 32, 128>}, {pipeline_mode = #tpu.pipeline_mode<synchronous>, transform_indices = @transform_6, window_bounds = array<i64: 32, 128>}, {pipeline_mode = #tpu.pipeline_mode<synchronous>, transform_indices = @transform_7, window_bounds = array<i64: 1, 128>}, {pipeline_mode = #tpu.pipeline_mode<synchronous>, transform_indices = @transform_8, window_bounds = array<i64: 16, 64>}, {pipeline_mode = #tpu.pipeline_mode<synchronous>, transform_indices = @transform_9, window_bounds = array<i64: 32, 64>}, {pipeline_mode = #tpu.pipeline_mode<synchronous>, transform_indices = @transform_10, window_bounds = array<i64: 32, 64>}, {pipeline_mode = #tpu.pipeline_mode<synchronous>, transform_indices = @transform_11, window_bounds = array<i64: 1, 64>}, {pipeline_mode = #tpu.pipeline_mode<synchronous>, transform_indices = @transform_12, window_bounds = array<i64: 64, 32>}, {pipeline_mode = #tpu.pipeline_mode<synchronous>, transform_indices = @transform_13, window_bounds = array<i64: 1, 32>}, {pipeline_mode = #tpu.pipeline_mode<synchronous>, transform_indices = @transform_14, window_bounds = array<i64: 1, 32>}, {pipeline_mode = #tpu.pipeline_mode<synchronous>, transform_indices = @transform_15, window_bounds = array<i64: 1, 1>}, {transform_indices = @transform_16, window_bounds = array<i64: 16, 1>}]} {
    %c2 = arith.constant 2 : index
    %c0 = arith.constant 0 : index
    %c0_0 = arith.constant 0 : index
    %0 = vector.load %arg1[%c2, %c0, %c0_0] : memref<11x16x16xbf16, #tpu.memory_space<vmem>>, vector<9x16x16xbf16>
    %1 = vector.shape_cast %0 : vector<9x16x16xbf16> to vector<144x16xbf16>
    %c0_1 = arith.constant 0 : index
    %c0_2 = arith.constant 0 : index
    %2 = vector.load %arg2[%c0_1, %c0_2] : memref<16x128xbf16, #tpu.memory_space<vmem>>, vector<16x128xbf16>
    %cst = arith.constant dense<0.000000e+00> : vector<144x128xf32>
    %3 = tpu.matmul %1, %2, %cst {dimension_numbers = #tpu.dot_dimension_numbers<[1], [0], [0], [1], [0, 0, 1, 1], [], []>} : vector<144x16xbf16>, vector<16x128xbf16>, vector<144x128xf32> -> vector<144x128xf32>
    %c0_3 = arith.constant 0 : index
    %c0_4 = arith.constant 0 : index
    %4 = vector.load %arg4[%c0_3, %c0_4] : memref<1x128xf32, #tpu.memory_space<vmem>>, vector<1x128xf32>
    %5 = vector.broadcast %4 : vector<1x128xf32> to vector<144x128xf32>
    %6 = arith.addf %3, %5 : vector<144x128xf32>
    %c0_5 = arith.constant 0 : index
    %c0_6 = arith.constant 0 : index
    %7 = vector.load %arg3[%c0_5, %c0_6] : memref<32x128xbf16, #tpu.memory_space<vmem>>, vector<32x128xbf16>
    %cst_7 = arith.constant 0.000000e+00 : f32
    %8 = vector.broadcast %cst_7 : f32 to vector<48x32xf32>
    %9 = vector.extract_strided_slice %6 {offsets = [0, 0], sizes = [48, 128], strides = [1, 1]} : vector<144x128xf32> to vector<48x128xf32>
    %10 = math.tanh %9 : vector<48x128xf32>
    %11 = vector.extract_strided_slice %10 {offsets = [0, 0], sizes = [48, 32], strides = [1, 1]} : vector<48x128xf32> to vector<48x32xf32>
    %cst_8 = arith.constant 1.000000e+00 : f32
    %12 = vector.broadcast %cst_8 : f32 to vector<48x32xf32>
    %13 = arith.addf %11, %12 : vector<48x32xf32>
    %cst_9 = arith.constant 5.000000e-01 : f32
    %14 = vector.broadcast %cst_9 : f32 to vector<48x32xf32>
    %15 = arith.mulf %14, %13 : vector<48x32xf32>
    %16 = vector.extract_strided_slice %10 {offsets = [0, 32], sizes = [48, 32], strides = [1, 1]} : vector<48x128xf32> to vector<48x32xf32>
    %cst_10 = arith.constant 1.000000e+00 : f32
    %17 = vector.broadcast %cst_10 : f32 to vector<48x32xf32>
    %18 = arith.addf %16, %17 : vector<48x32xf32>
    %cst_11 = arith.constant 5.000000e-01 : f32
    %19 = vector.broadcast %cst_11 : f32 to vector<48x32xf32>
    %20 = arith.mulf %19, %18 : vector<48x32xf32>
    %21 = vector.extract_strided_slice %10 {offsets = [0, 64], sizes = [48, 32], strides = [1, 1]} : vector<48x128xf32> to vector<48x32xf32>
    %22 = vector.extract_strided_slice %10 {offsets = [0, 96], sizes = [48, 32], strides = [1, 1]} : vector<48x128xf32> to vector<48x32xf32>
    %cst_12 = arith.constant 1.000000e+00 : f32
    %23 = vector.broadcast %cst_12 : f32 to vector<48x32xf32>
    %24 = arith.addf %22, %23 : vector<48x32xf32>
    %cst_13 = arith.constant 5.000000e-01 : f32
    %25 = vector.broadcast %cst_13 : f32 to vector<48x32xf32>
    %26 = arith.mulf %25, %24 : vector<48x32xf32>
    %27 = arith.mulf %20, %8 : vector<48x32xf32>
    %28 = arith.mulf %15, %21 : vector<48x32xf32>
    %29 = arith.addf %27, %28 : vector<48x32xf32>
    %30 = math.tanh %29 : vector<48x32xf32>
    %31 = arith.mulf %26, %30 : vector<48x32xf32>
    %32 = vector.extract_strided_slice %6 {offsets = [48, 0], sizes = [48, 128], strides = [1, 1]} : vector<144x128xf32> to vector<48x128xf32>
    %33 = arith.truncf %31 : vector<48x32xf32> to vector<48x32xbf16>
    %cst_14 = arith.constant dense<0.000000e+00> : vector<48x128xf32>
    %34 = tpu.matmul %33, %7, %cst_14 {dimension_numbers = #tpu.dot_dimension_numbers<[1], [0], [0], [1], [0, 0, 1, 1], [], []>} : vector<48x32xbf16>, vector<32x128xbf16>, vector<48x128xf32> -> vector<48x128xf32>
    %35 = arith.addf %32, %34 : vector<48x128xf32>
    %36 = math.tanh %35 : vector<48x128xf32>
    %37 = vector.extract_strided_slice %36 {offsets = [0, 0], sizes = [48, 32], strides = [1, 1]} : vector<48x128xf32> to vector<48x32xf32>
    %cst_15 = arith.constant 1.000000e+00 : f32
    %38 = vector.broadcast %cst_15 : f32 to vector<48x32xf32>
    %39 = arith.addf %37, %38 : vector<48x32xf32>
    %cst_16 = arith.constant 5.000000e-01 : f32
    %40 = vector.broadcast %cst_16 : f32 to vector<48x32xf32>
    %41 = arith.mulf %40, %39 : vector<48x32xf32>
    %42 = vector.extract_strided_slice %36 {offsets = [0, 32], sizes = [48, 32], strides = [1, 1]} : vector<48x128xf32> to vector<48x32xf32>
    %cst_17 = arith.constant 1.000000e+00 : f32
    %43 = vector.broadcast %cst_17 : f32 to vector<48x32xf32>
    %44 = arith.addf %42, %43 : vector<48x32xf32>
    %cst_18 = arith.constant 5.000000e-01 : f32
    %45 = vector.broadcast %cst_18 : f32 to vector<48x32xf32>
    %46 = arith.mulf %45, %44 : vector<48x32xf32>
    %47 = vector.extract_strided_slice %36 {offsets = [0, 64], sizes = [48, 32], strides = [1, 1]} : vector<48x128xf32> to vector<48x32xf32>
    %48 = vector.extract_strided_slice %36 {offsets = [0, 96], sizes = [48, 32], strides = [1, 1]} : vector<48x128xf32> to vector<48x32xf32>
    %cst_19 = arith.constant 1.000000e+00 : f32
    %49 = vector.broadcast %cst_19 : f32 to vector<48x32xf32>
    %50 = arith.addf %48, %49 : vector<48x32xf32>
    %cst_20 = arith.constant 5.000000e-01 : f32
    %51 = vector.broadcast %cst_20 : f32 to vector<48x32xf32>
    %52 = arith.mulf %51, %50 : vector<48x32xf32>
    %53 = arith.mulf %46, %29 : vector<48x32xf32>
    %54 = arith.mulf %41, %47 : vector<48x32xf32>
    %55 = arith.addf %53, %54 : vector<48x32xf32>
    %56 = math.tanh %55 : vector<48x32xf32>
    %57 = arith.mulf %52, %56 : vector<48x32xf32>
    %58 = vector.extract_strided_slice %6 {offsets = [96, 0], sizes = [48, 128], strides = [1, 1]} : vector<144x128xf32> to vector<48x128xf32>
    %59 = arith.truncf %57 : vector<48x32xf32> to vector<48x32xbf16>
    %cst_21 = arith.constant dense<0.000000e+00> : vector<48x128xf32>
    %60 = tpu.matmul %59, %7, %cst_21 {dimension_numbers = #tpu.dot_dimension_numbers<[1], [0], [0], [1], [0, 0, 1, 1], [], []>} : vector<48x32xbf16>, vector<32x128xbf16>, vector<48x128xf32> -> vector<48x128xf32>
    %61 = arith.addf %58, %60 : vector<48x128xf32>
    %62 = math.tanh %61 : vector<48x128xf32>
    %63 = vector.extract_strided_slice %62 {offsets = [0, 0], sizes = [48, 32], strides = [1, 1]} : vector<48x128xf32> to vector<48x32xf32>
    %cst_22 = arith.constant 1.000000e+00 : f32
    %64 = vector.broadcast %cst_22 : f32 to vector<48x32xf32>
    %65 = arith.addf %63, %64 : vector<48x32xf32>
    %cst_23 = arith.constant 5.000000e-01 : f32
    %66 = vector.broadcast %cst_23 : f32 to vector<48x32xf32>
    %67 = arith.mulf %66, %65 : vector<48x32xf32>
    %68 = vector.extract_strided_slice %62 {offsets = [0, 32], sizes = [48, 32], strides = [1, 1]} : vector<48x128xf32> to vector<48x32xf32>
    %cst_24 = arith.constant 1.000000e+00 : f32
    %69 = vector.broadcast %cst_24 : f32 to vector<48x32xf32>
    %70 = arith.addf %68, %69 : vector<48x32xf32>
    %cst_25 = arith.constant 5.000000e-01 : f32
    %71 = vector.broadcast %cst_25 : f32 to vector<48x32xf32>
    %72 = arith.mulf %71, %70 : vector<48x32xf32>
    %73 = vector.extract_strided_slice %62 {offsets = [0, 64], sizes = [48, 32], strides = [1, 1]} : vector<48x128xf32> to vector<48x32xf32>
    %74 = vector.extract_strided_slice %62 {offsets = [0, 96], sizes = [48, 32], strides = [1, 1]} : vector<48x128xf32> to vector<48x32xf32>
    %cst_26 = arith.constant 1.000000e+00 : f32
    %75 = vector.broadcast %cst_26 : f32 to vector<48x32xf32>
    %76 = arith.addf %74, %75 : vector<48x32xf32>
    %cst_27 = arith.constant 5.000000e-01 : f32
    %77 = vector.broadcast %cst_27 : f32 to vector<48x32xf32>
    %78 = arith.mulf %77, %76 : vector<48x32xf32>
    %79 = arith.mulf %72, %55 : vector<48x32xf32>
    %80 = arith.mulf %67, %73 : vector<48x32xf32>
    %81 = arith.addf %79, %80 : vector<48x32xf32>
    %82 = math.tanh %81 : vector<48x32xf32>
    %83 = arith.mulf %78, %82 : vector<48x32xf32>
    %84 = vector.extract_strided_slice %83 {offsets = [0, 0], sizes = [16, 32], strides = [1, 1]} : vector<48x32xf32> to vector<16x32xf32>
    %85 = vector.extract_strided_slice %83 {offsets = [16, 0], sizes = [32, 32], strides = [1, 1]} : vector<48x32xf32> to vector<32x32xf32>
    %c0_28 = arith.constant 0 : index
    %c0_29 = arith.constant 0 : index
    %c0_30 = arith.constant 0 : index
    %86 = vector.load %arg1[%c0_28, %c0_29, %c0_30] : memref<11x16x16xbf16, #tpu.memory_space<vmem>>, vector<2x16x16xbf16>
    %87 = vector.shape_cast %86 : vector<2x16x16xbf16> to vector<32x16xbf16>
    %c0_31 = arith.constant 0 : index
    %c0_32 = arith.constant 0 : index
    %88 = vector.load %arg5[%c0_31, %c0_32] : memref<16x128xbf16, #tpu.memory_space<vmem>>, vector<16x128xbf16>
    %cst_33 = arith.constant dense<0.000000e+00> : vector<32x128xf32>
    %89 = tpu.matmul %87, %88, %cst_33 {dimension_numbers = #tpu.dot_dimension_numbers<[1], [0], [0], [1], [0, 0, 1, 1], [], []>} : vector<32x16xbf16>, vector<16x128xbf16>, vector<32x128xf32> -> vector<32x128xf32>
    %90 = arith.truncf %85 : vector<32x32xf32> to vector<32x32xbf16>
    %c0_34 = arith.constant 0 : index
    %c0_35 = arith.constant 0 : index
    %91 = vector.load %arg6[%c0_34, %c0_35] : memref<32x128xbf16, #tpu.memory_space<vmem>>, vector<32x128xbf16>
    %cst_36 = arith.constant dense<0.000000e+00> : vector<32x128xf32>
    %92 = tpu.matmul %90, %91, %cst_36 {dimension_numbers = #tpu.dot_dimension_numbers<[1], [0], [0], [1], [0, 0, 1, 1], [], []>} : vector<32x32xbf16>, vector<32x128xbf16>, vector<32x128xf32> -> vector<32x128xf32>
    %93 = arith.addf %89, %92 : vector<32x128xf32>
    %c0_37 = arith.constant 0 : index
    %c0_38 = arith.constant 0 : index
    %94 = vector.load %arg8[%c0_37, %c0_38] : memref<1x128xf32, #tpu.memory_space<vmem>>, vector<1x128xf32>
    %95 = vector.broadcast %94 : vector<1x128xf32> to vector<32x128xf32>
    %96 = arith.addf %93, %95 : vector<32x128xf32>
    %c0_39 = arith.constant 0 : index
    %c0_40 = arith.constant 0 : index
    %97 = vector.load %arg7[%c0_39, %c0_40] : memref<32x128xbf16, #tpu.memory_space<vmem>>, vector<32x128xbf16>
    %98 = vector.extract_strided_slice %96 {offsets = [0, 0], sizes = [16, 128], strides = [1, 1]} : vector<32x128xf32> to vector<16x128xf32>
    %cst_41 = arith.constant 0.000000e+00 : f32
    %99 = vector.broadcast %cst_41 : f32 to vector<16x32xf32>
    %100 = math.tanh %98 : vector<16x128xf32>
    %101 = vector.extract_strided_slice %100 {offsets = [0, 0], sizes = [16, 32], strides = [1, 1]} : vector<16x128xf32> to vector<16x32xf32>
    %cst_42 = arith.constant 1.000000e+00 : f32
    %102 = vector.broadcast %cst_42 : f32 to vector<16x32xf32>
    %103 = arith.addf %101, %102 : vector<16x32xf32>
    %cst_43 = arith.constant 5.000000e-01 : f32
    %104 = vector.broadcast %cst_43 : f32 to vector<16x32xf32>
    %105 = arith.mulf %104, %103 : vector<16x32xf32>
    %106 = vector.extract_strided_slice %100 {offsets = [0, 32], sizes = [16, 32], strides = [1, 1]} : vector<16x128xf32> to vector<16x32xf32>
    %cst_44 = arith.constant 1.000000e+00 : f32
    %107 = vector.broadcast %cst_44 : f32 to vector<16x32xf32>
    %108 = arith.addf %106, %107 : vector<16x32xf32>
    %cst_45 = arith.constant 5.000000e-01 : f32
    %109 = vector.broadcast %cst_45 : f32 to vector<16x32xf32>
    %110 = arith.mulf %109, %108 : vector<16x32xf32>
    %111 = vector.extract_strided_slice %100 {offsets = [0, 64], sizes = [16, 32], strides = [1, 1]} : vector<16x128xf32> to vector<16x32xf32>
    %112 = vector.extract_strided_slice %100 {offsets = [0, 96], sizes = [16, 32], strides = [1, 1]} : vector<16x128xf32> to vector<16x32xf32>
    %cst_46 = arith.constant 1.000000e+00 : f32
    %113 = vector.broadcast %cst_46 : f32 to vector<16x32xf32>
    %114 = arith.addf %112, %113 : vector<16x32xf32>
    %cst_47 = arith.constant 5.000000e-01 : f32
    %115 = vector.broadcast %cst_47 : f32 to vector<16x32xf32>
    %116 = arith.mulf %115, %114 : vector<16x32xf32>
    %117 = arith.mulf %110, %99 : vector<16x32xf32>
    %118 = arith.mulf %105, %111 : vector<16x32xf32>
    %119 = arith.addf %117, %118 : vector<16x32xf32>
    %120 = math.tanh %119 : vector<16x32xf32>
    %121 = arith.mulf %116, %120 : vector<16x32xf32>
    %122 = vector.extract_strided_slice %96 {offsets = [16, 0], sizes = [16, 128], strides = [1, 1]} : vector<32x128xf32> to vector<16x128xf32>
    %123 = arith.truncf %121 : vector<16x32xf32> to vector<16x32xbf16>
    %cst_48 = arith.constant dense<0.000000e+00> : vector<16x128xf32>
    %124 = tpu.matmul %123, %97, %cst_48 {dimension_numbers = #tpu.dot_dimension_numbers<[1], [0], [0], [1], [0, 0, 1, 1], [], []>} : vector<16x32xbf16>, vector<32x128xbf16>, vector<16x128xf32> -> vector<16x128xf32>
    %125 = arith.addf %122, %124 : vector<16x128xf32>
    %126 = math.tanh %125 : vector<16x128xf32>
    %127 = vector.extract_strided_slice %126 {offsets = [0, 0], sizes = [16, 32], strides = [1, 1]} : vector<16x128xf32> to vector<16x32xf32>
    %cst_49 = arith.constant 1.000000e+00 : f32
    %128 = vector.broadcast %cst_49 : f32 to vector<16x32xf32>
    %129 = arith.addf %127, %128 : vector<16x32xf32>
    %cst_50 = arith.constant 5.000000e-01 : f32
    %130 = vector.broadcast %cst_50 : f32 to vector<16x32xf32>
    %131 = arith.mulf %130, %129 : vector<16x32xf32>
    %132 = vector.extract_strided_slice %126 {offsets = [0, 32], sizes = [16, 32], strides = [1, 1]} : vector<16x128xf32> to vector<16x32xf32>
    %cst_51 = arith.constant 1.000000e+00 : f32
    %133 = vector.broadcast %cst_51 : f32 to vector<16x32xf32>
    %134 = arith.addf %132, %133 : vector<16x32xf32>
    %cst_52 = arith.constant 5.000000e-01 : f32
    %135 = vector.broadcast %cst_52 : f32 to vector<16x32xf32>
    %136 = arith.mulf %135, %134 : vector<16x32xf32>
    %137 = vector.extract_strided_slice %126 {offsets = [0, 64], sizes = [16, 32], strides = [1, 1]} : vector<16x128xf32> to vector<16x32xf32>
    %138 = vector.extract_strided_slice %126 {offsets = [0, 96], sizes = [16, 32], strides = [1, 1]} : vector<16x128xf32> to vector<16x32xf32>
    %cst_53 = arith.constant 1.000000e+00 : f32
    %139 = vector.broadcast %cst_53 : f32 to vector<16x32xf32>
    %140 = arith.addf %138, %139 : vector<16x32xf32>
    %cst_54 = arith.constant 5.000000e-01 : f32
    %141 = vector.broadcast %cst_54 : f32 to vector<16x32xf32>
    %142 = arith.mulf %141, %140 : vector<16x32xf32>
    %143 = arith.mulf %136, %119 : vector<16x32xf32>
    %144 = arith.mulf %131, %137 : vector<16x32xf32>
    %145 = arith.addf %143, %144 : vector<16x32xf32>
    %146 = math.tanh %145 : vector<16x32xf32>
    %147 = arith.mulf %142, %146 : vector<16x32xf32>
    %148 = vector.extract_strided_slice %87 {offsets = [0, 0], sizes = [16, 16], strides = [1, 1]} : vector<32x16xbf16> to vector<16x16xbf16>
    %c0_55 = arith.constant 0 : index
    %c0_56 = arith.constant 0 : index
    %149 = vector.load %arg9[%c0_55, %c0_56] : memref<16x64xbf16, #tpu.memory_space<vmem>>, vector<16x64xbf16>
    %cst_57 = arith.constant dense<0.000000e+00> : vector<16x64xf32>
    %150 = tpu.matmul %148, %149, %cst_57 {dimension_numbers = #tpu.dot_dimension_numbers<[1], [0], [0], [1], [0, 0, 1, 1], [], []>} : vector<16x16xbf16>, vector<16x64xbf16>, vector<16x64xf32> -> vector<16x64xf32>
    %151 = arith.truncf %147 : vector<16x32xf32> to vector<16x32xbf16>
    %c0_58 = arith.constant 0 : index
    %c0_59 = arith.constant 0 : index
    %152 = vector.load %arg10[%c0_58, %c0_59] : memref<32x64xbf16, #tpu.memory_space<vmem>>, vector<32x64xbf16>
    %cst_60 = arith.constant dense<0.000000e+00> : vector<16x64xf32>
    %153 = tpu.matmul %151, %152, %cst_60 {dimension_numbers = #tpu.dot_dimension_numbers<[1], [0], [0], [1], [0, 0, 1, 1], [], []>} : vector<16x32xbf16>, vector<32x64xbf16>, vector<16x64xf32> -> vector<16x64xf32>
    %154 = arith.addf %150, %153 : vector<16x64xf32>
    %155 = arith.truncf %84 : vector<16x32xf32> to vector<16x32xbf16>
    %c0_61 = arith.constant 0 : index
    %c0_62 = arith.constant 0 : index
    %156 = vector.load %arg11[%c0_61, %c0_62] : memref<32x64xbf16, #tpu.memory_space<vmem>>, vector<32x64xbf16>
    %cst_63 = arith.constant dense<0.000000e+00> : vector<16x64xf32>
    %157 = tpu.matmul %155, %156, %cst_63 {dimension_numbers = #tpu.dot_dimension_numbers<[1], [0], [0], [1], [0, 0, 1, 1], [], []>} : vector<16x32xbf16>, vector<32x64xbf16>, vector<16x64xf32> -> vector<16x64xf32>
    %158 = arith.addf %154, %157 : vector<16x64xf32>
    %c0_64 = arith.constant 0 : index
    %c0_65 = arith.constant 0 : index
    %159 = vector.load %arg12[%c0_64, %c0_65] : memref<1x64xf32, #tpu.memory_space<vmem>>, vector<1x64xf32>
    %160 = vector.broadcast %159 : vector<1x64xf32> to vector<16x64xf32>
    %161 = arith.addf %158, %160 : vector<16x64xf32>
    %cst_66 = arith.constant 0.000000e+00 : f32
    %162 = vector.broadcast %cst_66 : f32 to vector<16x64xf32>
    %163 = arith.maximumf %161, %162 : vector<16x64xf32>
    %164 = arith.truncf %163 : vector<16x64xf32> to vector<16x64xbf16>
    %c0_67 = arith.constant 0 : index
    %c0_68 = arith.constant 0 : index
    %165 = vector.load %arg13[%c0_67, %c0_68] : memref<64x32xbf16, #tpu.memory_space<vmem>>, vector<64x32xbf16>
    %cst_69 = arith.constant dense<0.000000e+00> : vector<16x32xf32>
    %166 = tpu.matmul %164, %165, %cst_69 {dimension_numbers = #tpu.dot_dimension_numbers<[1], [0], [0], [1], [0, 0, 1, 1], [], []>} : vector<16x64xbf16>, vector<64x32xbf16>, vector<16x32xf32> -> vector<16x32xf32>
    %c0_70 = arith.constant 0 : index
    %c0_71 = arith.constant 0 : index
    %167 = vector.load %arg14[%c0_70, %c0_71] : memref<1x32xf32, #tpu.memory_space<vmem>>, vector<1x32xf32>
    %168 = vector.broadcast %167 : vector<1x32xf32> to vector<16x32xf32>
    %169 = arith.addf %166, %168 : vector<16x32xf32>
    %cst_72 = arith.constant 0.000000e+00 : f32
    %170 = vector.broadcast %cst_72 : f32 to vector<16x32xf32>
    %171 = arith.maximumf %169, %170 : vector<16x32xf32>
    %c0_73 = arith.constant 0 : index
    %c0_74 = arith.constant 0 : index
    %172 = vector.load %arg15[%c0_73, %c0_74] : memref<1x32xf32, #tpu.memory_space<vmem>>, vector<1x32xf32>
    %173 = vector.broadcast %172 : vector<1x32xf32> to vector<16x32xf32>
    %174 = arith.mulf %171, %173 : vector<16x32xf32>
    %cst_75 = arith.constant dense<0.000000e+00> : vector<16xf32>
    %175 = vector.multi_reduction <add>, %174, %cst_75 [1] : vector<16x32xf32> to vector<16xf32>
    %176 = vector.shape_cast %175 : vector<16xf32> to vector<16x1xf32>
    %c0_76 = arith.constant 0 : index
    %c0_77 = arith.constant 0 : index
    %177 = vector.load %arg16[%c0_76, %c0_77] : memref<1x1xf32, #tpu.memory_space<vmem>>, vector<1x1xf32>
    %178 = vector.broadcast %177 : vector<1x1xf32> to vector<16x1xf32>
    %179 = arith.addf %176, %178 : vector<16x1xf32>
    %c0_78 = arith.constant 0 : index
    %c0_79 = arith.constant 0 : index
    %180 = vector.load %arg17[%c0_78, %c0_79] : memref<16x1xf32, #tpu.memory_space<vmem>>, vector<16x1xf32>
    tpu.vector_store %arg17[%c0_78, %c0_79], %179 {strides = array<i32>} : memref<16x1xf32, #tpu.memory_space<vmem>>, vector<16x1xf32>,
    return
  }
  func.func @transform_0(%arg0: i32) -> (i32, i32, i32) {
    %c0_i32 = arith.constant 0 : i32
    %c0_i32_0 = arith.constant 0 : i32
    %c0_i32_1 = arith.constant 0 : i32
    return %c0_i32, %arg0, %c0_i32_0 : i32, i32, i32
  }
  func.func @transform_1(%arg0: i32) -> (i32, i32) {
    %c0_i32 = arith.constant 0 : i32
    %c0_i32_0 = arith.constant 0 : i32
    %c0_i32_1 = arith.constant 0 : i32
    return %c0_i32, %c0_i32_0 : i32, i32
  }
  func.func @transform_2(%arg0: i32) -> (i32, i32) {
    %c0_i32 = arith.constant 0 : i32
    %c0_i32_0 = arith.constant 0 : i32
    %c0_i32_1 = arith.constant 0 : i32
    return %c0_i32, %c0_i32_0 : i32, i32
  }
  func.func @transform_3(%arg0: i32) -> (i32, i32) {
    %c0_i32 = arith.constant 0 : i32
    %c0_i32_0 = arith.constant 0 : i32
    %c0_i32_1 = arith.constant 0 : i32
    return %c0_i32, %c0_i32_0 : i32, i32
  }
  func.func @transform_4(%arg0: i32) -> (i32, i32) {
    %c0_i32 = arith.constant 0 : i32
    %c0_i32_0 = arith.constant 0 : i32
    %c0_i32_1 = arith.constant 0 : i32
    return %c0_i32, %c0_i32_0 : i32, i32
  }
  func.func @transform_5(%arg0: i32) -> (i32, i32) {
    %c0_i32 = arith.constant 0 : i32
    %c0_i32_0 = arith.constant 0 : i32
    %c0_i32_1 = arith.constant 0 : i32
    return %c0_i32, %c0_i32_0 : i32, i32
  }
  func.func @transform_6(%arg0: i32) -> (i32, i32) {
    %c0_i32 = arith.constant 0 : i32
    %c0_i32_0 = arith.constant 0 : i32
    %c0_i32_1 = arith.constant 0 : i32
    return %c0_i32, %c0_i32_0 : i32, i32
  }
  func.func @transform_7(%arg0: i32) -> (i32, i32) {
    %c0_i32 = arith.constant 0 : i32
    %c0_i32_0 = arith.constant 0 : i32
    %c0_i32_1 = arith.constant 0 : i32
    return %c0_i32, %c0_i32_0 : i32, i32
  }
  func.func @transform_8(%arg0: i32) -> (i32, i32) {
    %c0_i32 = arith.constant 0 : i32
    %c0_i32_0 = arith.constant 0 : i32
    %c0_i32_1 = arith.constant 0 : i32
    return %c0_i32, %c0_i32_0 : i32, i32
  }
  func.func @transform_9(%arg0: i32) -> (i32, i32) {
    %c0_i32 = arith.constant 0 : i32
    %c0_i32_0 = arith.constant 0 : i32
    %c0_i32_1 = arith.constant 0 : i32
    return %c0_i32, %c0_i32_0 : i32, i32
  }
  func.func @transform_10(%arg0: i32) -> (i32, i32) {
    %c0_i32 = arith.constant 0 : i32
    %c0_i32_0 = arith.constant 0 : i32
    %c0_i32_1 = arith.constant 0 : i32
    return %c0_i32, %c0_i32_0 : i32, i32
  }
  func.func @transform_11(%arg0: i32) -> (i32, i32) {
    %c0_i32 = arith.constant 0 : i32
    %c0_i32_0 = arith.constant 0 : i32
    %c0_i32_1 = arith.constant 0 : i32
    return %c0_i32, %c0_i32_0 : i32, i32
  }
  func.func @transform_12(%arg0: i32) -> (i32, i32) {
    %c0_i32 = arith.constant 0 : i32
    %c0_i32_0 = arith.constant 0 : i32
    %c0_i32_1 = arith.constant 0 : i32
    return %c0_i32, %c0_i32_0 : i32, i32
  }
  func.func @transform_13(%arg0: i32) -> (i32, i32) {
    %c0_i32 = arith.constant 0 : i32
    %c0_i32_0 = arith.constant 0 : i32
    %c0_i32_1 = arith.constant 0 : i32
    return %c0_i32, %c0_i32_0 : i32, i32
  }
  func.func @transform_14(%arg0: i32) -> (i32, i32) {
    %c0_i32 = arith.constant 0 : i32
    %c0_i32_0 = arith.constant 0 : i32
    %c0_i32_1 = arith.constant 0 : i32
    return %c0_i32, %c0_i32_0 : i32, i32
  }
  func.func @transform_15(%arg0: i32) -> (i32, i32) {
    %c0_i32 = arith.constant 0 : i32
    %c0_i32_0 = arith.constant 0 : i32
    %c0_i32_1 = arith.constant 0 : i32
    return %c0_i32, %c0_i32_0 : i32, i32
  }
  func.func @transform_16(%arg0: i32) -> (i32, i32) {
    %c0_i32 = arith.constant 0 : i32
    %c0_i32_0 = arith.constant 0 : i32
    return %arg0, %c0_i32 : i32, i32
  }
}

</mosaic_0001>

<llo_original>
// kernel: value_network_forward.1
$region0: #{value_network_forward.1}
  #allocation0 [shape = 'u32[]', space=smem, size = 0x4, offset = 0x4, fixed_abs, tag = 'smem constant byte address 0x4 - core index']
  #allocation1 [shape = 'u32[144,128]{1,0:T(1,128)}', space=vmem, size = 0x12000, scoped, tag = 'internal scratch']
  #allocation2 [shape = 'f32[1,1]{1,0:T(1,128)S(1)}', space=vmem, size = 0x200, scoped, tag = 'scoped memory for value_network_forward.1']
  %s0 = inlined_call_operand.vmem [shape: bf16[11,16,16], index: 0, kind: input, shape index: {}]
  %s1 = inlined_call_operand.vmem [shape: bf16[16,128], index: 1, kind: input, shape index: {}]
  %s2 = inlined_call_operand.vmem [shape: bf16[32,128], index: 2, kind: input, shape index: {}]
  %s3 = inlined_call_operand.vmem [shape: f32[1,128], index: 3, kind: input, shape index: {}]
  %s4 = inlined_call_operand.vmem [shape: bf16[16,128], index: 4, kind: input, shape index: {}]
  %s5 = inlined_call_operand.vmem [shape: bf16[32,128], index: 5, kind: input, shape index: {}]
  %s6 = inlined_call_operand.vmem [shape: bf16[32,128], index: 6, kind: input, shape index: {}]
  %s7 = inlined_call_operand.vmem [shape: f32[1,128], index: 7, kind: input, shape index: {}]
  %s8 = inlined_call_operand.vmem [shape: bf16[16,64], index: 8, kind: input, shape index: {}]
  %s9 = inlined_call_operand.vmem [shape: bf16[32,64], index: 9, kind: input, shape index: {}]
  %s10 = inlined_call_operand.vmem [shape: bf16[32,64], index: 10, kind: input, shape index: {}]
  %s11 = inlined_call_operand.vmem [shape: f32[1,64], index: 11, kind: input, shape index: {}]
  %s12 = inlined_call_operand.vmem [shape: bf16[64,32], index: 12, kind: input, shape index: {}]
  %s13 = inlined_call_operand.vmem [shape: f32[1,32], index: 13, kind: input, shape index: {}]
  %s14 = inlined_call_operand.vmem [shape: f32[1,32], index: 14, kind: input, shape index: {}]
  %s15 = inlined_call_operand.<no memory space> [shape: f32[1,1], index: 15, kind: input, shape index: {}]
  %s16 = inlined_call_operand.vmem [shape: f32[16,1], index: 16, kind: output, shape index: {}]
  %s17 = sld [smem:[#allocation0]]
  $region74: #{value_network_forward.1} parent=0
    _
  %s19 = ssub.s32 1, %s17
  %s20 = scalar_select 0, %s19, %s17
  %v21 = vstv %s15
  %22 = vst [vmem:[#allocation2] sm:$0x1] %v21
  // Predicated region
  $region2: #{value_network_forward.1} parent=0 // pred_check
    _
  $region3: #{value_network_forward.1} parent=0 // pred_check_branch
    %24 = sbr.rel (0) target = $region5
  $region4: #{value_network_forward.1} parent=0 // pred_region
    _
  $region5: #{value_network_forward.1} parent=0 // pred_fallthru
    _
  // Predicated region
  $region6: #{value_network_forward.1} parent=0 // pred_check
    _
  $region7: #{value_network_forward.1} parent=0 // pred_check_branch
    %26 = sbr.rel (0) target = $region9
  $region8: #{value_network_forward.1} parent=0 // pred_region
    _
  $region9: #{value_network_forward.1} parent=0 // pred_fallthru
    _
  // Predicated region
  $region10: #{value_network_forward.1} parent=0 // pred_check
    _
  $region11: #{value_network_forward.1} parent=0 // pred_check_branch
    %28 = sbr.rel (0) target = $region13
  $region12: #{value_network_forward.1} parent=0 // pred_region
    _
  $region13: #{value_network_forward.1} parent=0 // pred_fallthru
    _
  // Predicated region
  $region14: #{value_network_forward.1} parent=0 // pred_check
    _
  $region15: #{value_network_forward.1} parent=0 // pred_check_branch
    %30 = sbr.rel (0) target = $region17
  $region16: #{value_network_forward.1} parent=0 // pred_region
    _
  $region17: #{value_network_forward.1} parent=0 // pred_fallthru
    _
  // Predicated region
  $region18: #{value_network_forward.1} parent=0 // pred_check
    _
  $region19: #{value_network_forward.1} parent=0 // pred_check_branch
    %32 = sbr.rel (0) target = $region21
  $region20: #{value_network_forward.1} parent=0 // pred_region
    _
  $region21: #{value_network_forward.1} parent=0 // pred_fallthru
    _
  // Predicated region
  $region22: #{value_network_forward.1} parent=0 // pred_check
    _
  $region23: #{value_network_forward.1} parent=0 // pred_check_branch
    %34 = sbr.rel (0) target = $region25
  $region24: #{value_network_forward.1} parent=0 // pred_region
    _
  $region25: #{value_network_forward.1} parent=0 // pred_fallthru
    _
  // Predicated region
  $region26: #{value_network_forward.1} parent=0 // pred_check
    _
  $region27: #{value_network_forward.1} parent=0 // pred_check_branch
    %36 = sbr.rel (0) target = $region29
  $region28: #{value_network_forward.1} parent=0 // pred_region
    _
  $region29: #{value_network_forward.1} parent=0 // pred_fallthru
    _
  // Predicated region
  $region30: #{value_network_forward.1} parent=0 // pred_check
    _
  $region31: #{value_network_forward.1} parent=0 // pred_check_branch
    %38 = sbr.rel (0) target = $region33
  $region32: #{value_network_forward.1} parent=0 // pred_region
    _
  $region33: #{value_network_forward.1} parent=0 // pred_fallthru
    _
  // Predicated region
  $region34: #{value_network_forward.1} parent=0 // pred_check
    _
  $region35: #{value_network_forward.1} parent=0 // pred_check_branch
    %40 = sbr.rel (0) target = $region37
  $region36: #{value_network_forward.1} parent=0 // pred_region
    _
  $region37: #{value_network_forward.1} parent=0 // pred_fallthru
    _
  // Predicated region
  $region38: #{value_network_forward.1} parent=0 // pred_check
    _
  $region39: #{value_network_forward.1} parent=0 // pred_check_branch
    %42 = sbr.rel (0) target = $region41
  $region40: #{value_network_forward.1} parent=0 // pred_region
    _
  $region41: #{value_network_forward.1} parent=0 // pred_fallthru
    _
  // Predicated region
  $region42: #{value_network_forward.1} parent=0 // pred_check
    _
  $region43: #{value_network_forward.1} parent=0 // pred_check_branch
    %44 = sbr.rel (0) target = $region45
  $region44: #{value_network_forward.1} parent=0 // pred_region
    _
  $region45: #{value_network_forward.1} parent=0 // pred_fallthru
    _
  // Predicated region
  $region46: #{value_network_forward.1} parent=0 // pred_check
    _
  $region47: #{value_network_forward.1} parent=0 // pred_check_branch
    %46 = sbr.rel (0) target = $region49
  $region48: #{value_network_forward.1} parent=0 // pred_region
    _
  $region49: #{value_network_forward.1} parent=0 // pred_fallthru
    _
  // Predicated region
  $region50: #{value_network_forward.1} parent=0 // pred_check
    _
  $region51: #{value_network_forward.1} parent=0 // pred_check_branch
    %48 = sbr.rel (0) target = $region53
  $region52: #{value_network_forward.1} parent=0 // pred_region
    _
  $region53: #{value_network_forward.1} parent=0 // pred_fallthru
    _
  // Predicated region
  $region54: #{value_network_forward.1} parent=0 // pred_check
    _
  $region55: #{value_network_forward.1} parent=0 // pred_check_branch
    %50 = sbr.rel (0) target = $region57
  $region56: #{value_network_forward.1} parent=0 // pred_region
    _
  $region57: #{value_network_forward.1} parent=0 // pred_fallthru
    _
  // Predicated region
  $region58: #{value_network_forward.1} parent=0 // pred_check
    _
  $region59: #{value_network_forward.1} parent=0 // pred_check_branch
    %52 = sbr.rel (0) target = $region61
  $region60: #{value_network_forward.1} parent=0 // pred_region
    _
  $region61: #{value_network_forward.1} parent=0 // pred_fallthru
    _
  // Predicated region
  $region62: #{value_network_forward.1} parent=0 // pred_check
    _
  $region63: #{value_network_forward.1} parent=0 // pred_check_branch
    %54 = sbr.rel (0) target = $region65
  $region64: #{value_network_forward.1} parent=0 // pred_region
    _
  $region65: #{value_network_forward.1} parent=0 // pred_fallthru
    _
  %s56 = scalar_lea.vmem %s0, 16
  %v57 = vld [vmem:[%s56] sm:$0xf]
  %v58 = vld [vmem:[%s56 + $0x4] sm:$0xf]
  %v59 = vld [vmem:[%s56 + $0x8] sm:$0xf]
  %v60 = vld [vmem:[%s56 + $0xc] sm:$0xf]
  %v61 = vld [vmem:[%s56 + $0x10] sm:$0xf]
  %v62 = vld [vmem:[%s56 + $0x14] sm:$0xf]
  %v63 = vld [vmem:[%s56 + $0x18] sm:$0xf]
  %v64 = vld [vmem:[%s56 + $0x1c] sm:$0xf]
  %v65 = vld [vmem:[%s56 + $0x20] sm:$0xf]
  %v66 = vld [vmem:[%s56 + $0x24] sm:$0xf]
  %v67 = vld [vmem:[%s56 + $0x28] sm:$0xf]
  %v68 = vld [vmem:[%s56 + $0x2c] sm:$0xf]
  %v69 = vld [vmem:[%s56 + $0x30] sm:$0xf]
  %v70 = vld [vmem:[%s56 + $0x34] sm:$0xf]
  %v71 = vld [vmem:[%s56 + $0x38] sm:$0xf]
  %v72 = vld [vmem:[%s56 + $0x3c] sm:$0xf]
  %v73 = vld [vmem:[%s56 + $0x40] sm:$0xf]
  %v74 = vld [vmem:[%s56 + $0x44] sm:$0xf]
  %v75 = vld [vmem:[%s1] sm:$0xf]
  %v76 = vld [vmem:[%s1 + $0x4] sm:$0xf]
  %v77 = vld [vmem:[%s3] sm:$0x1]
  %v79 = vlaneseq
  %v80 = vshrl.u32 %v79, 7
  %v81 = vsub.s32 0, %v80
  %v82 = vrot.slane %v77, %v81
  %v102 = vunpack.c.l.b16 %v57
  %v103 = vunpack.c.l.b16 %v58
  %v104 = vunpack.c.l.b16 %v59
  %v105 = vunpack.c.l.b16 %v60
  %v106 = vunpack.c.l.b16 %v61
  %v107 = vunpack.c.l.b16 %v62
  %v108 = vunpack.c.l.b16 %v63
  %v109 = vunpack.c.l.b16 %v64
  %v110 = vunpack.c.l.b16 %v65
  %v111 = vunpack.c.l.b16 %v66
  %v112 = vunpack.c.l.b16 %v67
  %v113 = vunpack.c.l.b16 %v68
  %v114 = vunpack.c.l.b16 %v69
  %v115 = vunpack.c.l.b16 %v70
  %v116 = vunpack.c.l.b16 %v71
  %v117 = vunpack.c.l.b16 %v72
  %v118 = vunpack.c.l.b16 %v73
  %v119 = vunpack.c.l.b16 %v74
  %v120 = vpack.c.b16 %v103, %v102
  %v121 = vpack.c.b16 %v105, %v104
  %v122 = vpack.c.b16 %v107, %v106
  %v123 = vpack.c.b16 %v109, %v108
  %v124 = vpack.c.b16 %v111, %v110
  %v125 = vpack.c.b16 %v113, %v112
  %v126 = vpack.c.b16 %v115, %v114
  %v127 = vpack.c.b16 %v117, %v116
  %v128 = vpack.c.b16 %v119, %v118
  %v131 = vunpack.c.l.b16 %v75
  %v132 = vunpack.c.l.b16 %v76
  %v133 = vpack.c.b16 %v132, %v131
  %vm135 = vcmask 130048
  %v137 = vsel %vm135, %v120, 0
  %v140 = vsel %vm135, %v121, 0
  %v143 = vsel %vm135, %v122, 0
  %v146 = vsel %vm135, %v123, 0
  %v149 = vsel %vm135, %v124, 0
  %v152 = vsel %vm135, %v125, 0
  %v155 = vsel %vm135, %v126, 0
  %v158 = vsel %vm135, %v127, 0
  %v161 = vsel %vm135, %v128, 0
  %163 = vmatprep.subr.bf16.mxu0 0
  %164 = vmatpush1.bf16.msra.mxu0 %v133
  %165 = vmatprep.subr.bf16.mxu0 0
  %166 = vmatpush1.bf16.msra.mxu0 0
  %167 = vmatprep.subr.bf16.mxu0 0
  %168 = vmatpush1.bf16.msra.mxu0 0
  %169 = vmatprep.subr.bf16.mxu0 0
  %170 = vmatpush1.bf16.msra.mxu0 0
  %171 = vmatprep.subr.bf16.mxu0 0
  %172 = vmatpush1.bf16.msra.mxu0 0
  %173 = vmatprep.subr.bf16.mxu0 0
  %174 = vmatpush1.bf16.msra.mxu0 0
  %175 = vmatprep.subr.bf16.mxu0 0
  %176 = vmatpush1.bf16.msra.mxu0 0
  %177 = vmatprep.subr.bf16.mxu0 0
  %178 = vmatpush1.bf16.msra.mxu0 0
  %179 = vmatprep.subr.bf16.mxu0 0
  %180 = vmatpush1.bf16.msra.mxu0 0
  %181 = vmatprep.subr.bf16.mxu0 0
  %182 = vmatpush1.bf16.msra.mxu0 0
  %183 = vmatprep.subr.bf16.mxu0 0
  %184 = vmatpush1.bf16.msra.mxu0 0
  %185 = vmatprep.subr.bf16.mxu0 0
  %186 = vmatpush1.bf16.msra.mxu0 0
  %187 = vmatprep.subr.bf16.mxu0 0
  %188 = vmatpush1.bf16.msra.mxu0 0
  %189 = vmatprep.subr.bf16.mxu0 0
  %190 = vmatpush1.bf16.msra.mxu0 0
  %191 = vmatprep.subr.bf16.mxu0 0
  %192 = vmatpush1.bf16.msra.mxu0 0
  %193 = vmatprep.subr.bf16.mxu0 0
  %194 = vmatpush1.bf16.msra.mxu0 0
  %195 = vmatprep.mubr.bf16.mxu0 0
  %196 = vmatmul.mubr.bf16.gmra.mrb[0].mxu0 %v137
  %v197 = vpop.f32.mrb[0].mxu0
  %v198 = vadd.f32 %v82, %v197
  %v199 = vpop.f32.mrb[0].mxu0
  %v200 = vpop.f32.mrb[0].mxu0
  %v201 = vadd.f32 %v82, %v200
  %v202 = vpop.f32.mrb[0].mxu0
  %203 = vmatprep.mubr.bf16.mxu0 0
  %204 = vmatmul.mubr.bf16.gmra.mrb[0].mxu0 %v140
  %v205 = vpop.f32.mrb[0].mxu0
  %v206 = vadd.f32 %v82, %v205
  %v207 = vpop.f32.mrb[0].mxu0
  %v208 = vpop.f32.mrb[0].mxu0
  %v209 = vadd.f32 %v82, %v208
  %v210 = vpop.f32.mrb[0].mxu0
  %211 = vmatprep.mubr.bf16.mxu0 0
  %212 = vmatmul.mubr.bf16.gmra.mrb[0].mxu0 %v143
  %v213 = vpop.f32.mrb[0].mxu0
  %v214 = vadd.f32 %v82, %v213
  %v215 = vpop.f32.mrb[0].mxu0
  %v216 = vpop.f32.mrb[0].mxu0
  %v217 = vadd.f32 %v82, %v216
  %v218 = vpop.f32.mrb[0].mxu0
  %219 = vmatprep.mubr.bf16.mxu0 0
  %220 = vmatmul.mubr.bf16.gmra.mrb[0].mxu0 %v146
  %v221 = vpop.f32.mrb[0].mxu0
  %v222 = vadd.f32 %v82, %v221
  %v223 = vpop.f32.mrb[0].mxu0
  %v224 = vpop.f32.mrb[0].mxu0
  %v225 = vadd.f32 %v82, %v224
  %v226 = vpop.f32.mrb[0].mxu0
  %227 = vmatprep.mubr.bf16.mxu0 0
  %228 = vmatmul.mubr.bf16.gmra.mrb[0].mxu0 %v149
  %v229 = vpop.f32.mrb[0].mxu0
  %v230 = vadd.f32 %v82, %v229
  %v231 = vpop.f32.mrb[0].mxu0
  %v232 = vpop.f32.mrb[0].mxu0
  %v233 = vadd.f32 %v82, %v232
  %v234 = vpop.f32.mrb[0].mxu0
  %235 = vmatprep.mubr.bf16.mxu0 0
  %236 = vmatmul.mubr.bf16.gmra.mrb[0].mxu0 %v152
  %v237 = vpop.f32.mrb[0].mxu0
  %v238 = vadd.f32 %v82, %v237
  %v239 = vpop.f32.mrb[0].mxu0
  %v240 = vpop.f32.mrb[0].mxu0
  %v241 = vadd.f32 %v82, %v240
  %v242 = vpop.f32.mrb[0].mxu0
  %243 = vmatprep.mubr.bf16.mxu0 0
  %244 = vmatmul.mubr.bf16.gmra.mrb[0].mxu0 %v155
  %v245 = vpop.f32.mrb[0].mxu0
  %v246 = vadd.f32 %v82, %v245
  %v247 = vpop.f32.mrb[0].mxu0
  %v248 = vpop.f32.mrb[0].mxu0
  %v249 = vadd.f32 %v82, %v248
  %v250 = vpop.f32.mrb[0].mxu0
  %251 = vmatprep.mubr.bf16.mxu0 0
  %252 = vmatmul.mubr.bf16.gmra.mrb[0].mxu0 %v158
  %v253 = vpop.f32.mrb[0].mxu0
  %v254 = vadd.f32 %v82, %v253
  %v255 = vpop.f32.mrb[0].mxu0
  %v256 = vpop.f32.mrb[0].mxu0
  %v257 = vadd.f32 %v82, %v256
  %v258 = vpop.f32.mrb[0].mxu0
  %259 = vmatprep.mubr.bf16.mxu0 0
  %260 = vmatmul.mubr.bf16.gmra.mrb[0].mxu0 %v161
  %v261 = vpop.f32.mrb[0].mxu0
  %v262 = vadd.f32 %v82, %v261
  %v263 = vpop.f32.mrb[0].mxu0
  %v264 = vpop.f32.mrb[0].mxu0
  %v265 = vadd.f32 %v82, %v264
  %v266 = vpop.f32.mrb[0].mxu0
  %267 = vdwg.mxu0
  %v268 = vld [vmem:[%s2] sm:$0xf]
  %v269 = vld [vmem:[%s2 + $0x4] sm:$0xf]
  %v270 = vld [vmem:[%s2 + $0x8] sm:$0xf]
  %v271 = vld [vmem:[%s2 + $0xc] sm:$0xf]
  %v272 = vtanh.pop %v198
  %v273 = vtanh.pop %v201
  %v274 = vtanh.pop %v206
  %v275 = vtanh.pop %v209
  %v276 = vtanh.pop %v214
  %v277 = vtanh.pop %v217
  %v278 = vadd.f32 %v272, 1.0
  %v279 = vadd.f32 %v273, 1.0
  %v280 = vadd.f32 %v274, 1.0
  %v281 = vadd.f32 %v275, 1.0
  %v282 = vadd.f32 %v276, 1.0
  %v283 = vadd.f32 %v277, 1.0
  %v284 = vmul.f32 %v278, 0.5
  %v285 = vmul.f32 %v279, 0.5
  %v286 = vmul.f32 %v280, 0.5
  %v287 = vmul.f32 %v281, 0.5
  %v288 = vmul.f32 %v282, 0.5
  %v289 = vmul.f32 %v283, 0.5
  %v290 = vmul.f32 %v284, 0.0
  %v291 = vmul.f32 %v285, 0.0
  %v292 = vmul.f32 %v286, 0.0
  %v293 = vmul.f32 %v287, 0.0
  %v294 = vmul.f32 %v288, 0.0
  %v295 = vmul.f32 %v289, 0.0
  %302 = vrot.lane.b32.xlu0 %v272, 64
  %v303 = vpop.permute.xlu0 %302
  %304 = vrot.lane.b32.xlu0 %v273, 64
  %v305 = vpop.permute.xlu0 %304
  %306 = vrot.lane.b32.xlu0 %v274, 64
  %v307 = vpop.permute.xlu0 %306
  %308 = vrot.lane.b32.xlu0 %v275, 64
  %v309 = vpop.permute.xlu0 %308
  %310 = vrot.lane.b32.xlu0 %v276, 64
  %v311 = vpop.permute.xlu0 %310
  %312 = vrot.lane.b32.xlu0 %v277, 64
  %v313 = vpop.permute.xlu0 %312
  %v320 = vmul.f32 %v284, %v303
  %v321 = vmul.f32 %v285, %v305
  %v322 = vmul.f32 %v286, %v307
  %v323 = vmul.f32 %v287, %v309
  %v324 = vmul.f32 %v288, %v311
  %v325 = vmul.f32 %v289, %v313
  %332 = vrot.lane.b32.xlu0 %v320, 32
  %v333 = vpop.permute.xlu0 %332
  %334 = vrot.lane.b32.xlu0 %v321, 32
  %v335 = vpop.permute.xlu0 %334
  %336 = vrot.lane.b32.xlu0 %v322, 32
  %v337 = vpop.permute.xlu0 %336
  %338 = vrot.lane.b32.xlu0 %v323, 32
  %v339 = vpop.permute.xlu0 %338
  %340 = vrot.lane.b32.xlu0 %v324, 32
  %v341 = vpop.permute.xlu0 %340
  %342 = vrot.lane.b32.xlu0 %v325, 32
  %v343 = vpop.permute.xlu0 %342
  %v350 = vadd.f32 %v290, %v333
  %v351 = vadd.f32 %v291, %v335
  %v352 = vadd.f32 %v292, %v337
  %v353 = vadd.f32 %v293, %v339
  %v354 = vadd.f32 %v294, %v341
  %v355 = vadd.f32 %v295, %v343
  %v356 = vtanh.pop %v350
  %v357 = vtanh.pop %v351
  %v358 = vtanh.pop %v352
  %v359 = vtanh.pop %v353
  %v360 = vtanh.pop %v354
  %v361 = vtanh.pop %v355
  %368 = vrot.lane.b32.xlu0 %v356, 64
  %v369 = vpop.permute.xlu0 %368
  %370 = vrot.lane.b32.xlu0 %v357, 64
  %v371 = vpop.permute.xlu0 %370
  %372 = vrot.lane.b32.xlu0 %v358, 64
  %v373 = vpop.permute.xlu0 %372
  %374 = vrot.lane.b32.xlu0 %v359, 64
  %v375 = vpop.permute.xlu0 %374
  %376 = vrot.lane.b32.xlu0 %v360, 64
  %v377 = vpop.permute.xlu0 %376
  %378 = vrot.lane.b32.xlu0 %v361, 64
  %v379 = vpop.permute.xlu0 %378
  %v386 = vmul.f32 %v284, %v369
  %v387 = vmul.f32 %v285, %v371
  %v388 = vmul.f32 %v286, %v373
  %v389 = vmul.f32 %v287, %v375
  %v390 = vmul.f32 %v288, %v377
  %v391 = vmul.f32 %v289, %v379
  %v392 = vpack.c.bf16 %v387, %v386
  %v393 = vpack.c.bf16 %v389, %v388
  %v394 = vpack.c.bf16 %v391, %v390
  %398 = vrot.lane.b32.xlu0 %v392, 32
  %v399 = vpop.permute.xlu0 %398
  %400 = vrot.lane.b32.xlu0 %v393, 32
  %v401 = vpop.permute.xlu0 %400
  %402 = vrot.lane.b32.xlu0 %v394, 32
  %v403 = vpop.permute.xlu0 %402
  %v408 = vunpack.c.l.b16 %v268
  %v409 = vunpack.c.l.b16 %v269
  %v410 = vunpack.c.l.b16 %v270
  %v411 = vunpack.c.l.b16 %v271
  %v412 = vpack.c.b16 %v409, %v408
  %v413 = vpack.c.b16 %v411, %v410
  %vm416 = vcmask 261120
  %v418 = vsel %vm416, %v399, 0
  %v421 = vsel %vm416, %v401, 0
  %v424 = vsel %vm416, %v403, 0
  %426 = vmatprep.subr.bf16.mxu0 0
  %427 = vmatpush1.bf16.msra.mxu0 %v412
  %428 = vmatprep.subr.bf16.mxu0 0
  %429 = vmatpush1.bf16.msra.mxu0 %v413
  %430 = vmatprep.subr.bf16.mxu0 0
  %431 = vmatpush1.bf16.msra.mxu0 0
  %432 = vmatprep.subr.bf16.mxu0 0
  %433 = vmatpush1.bf16.msra.mxu0 0
  %434 = vmatprep.subr.bf16.mxu0 0
  %435 = vmatpush1.bf16.msra.mxu0 0
  %436 = vmatprep.subr.bf16.mxu0 0
  %437 = vmatpush1.bf16.msra.mxu0 0
  %438 = vmatprep.subr.bf16.mxu0 0
  %439 = vmatpush1.bf16.msra.mxu0 0
  %440 = vmatprep.subr.bf16.mxu0 0
  %441 = vmatpush1.bf16.msra.mxu0 0
  %442 = vmatprep.subr.bf16.mxu0 0
  %443 = vmatpush1.bf16.msra.mxu0 0
  %444 = vmatprep.subr.bf16.mxu0 0
  %445 = vmatpush1.bf16.msra.mxu0 0
  %446 = vmatprep.subr.bf16.mxu0 0
  %447 = vmatpush1.bf16.msra.mxu0 0
  %448 = vmatprep.subr.bf16.mxu0 0
  %449 = vmatpush1.bf16.msra.mxu0 0
  %450 = vmatprep.subr.bf16.mxu0 0
  %451 = vmatpush1.bf16.msra.mxu0 0
  %452 = vmatprep.subr.bf16.mxu0 0
  %453 = vmatpush1.bf16.msra.mxu0 0
  %454 = vmatprep.subr.bf16.mxu0 0
  %455 = vmatpush1.bf16.msra.mxu0 0
  %456 = vmatprep.subr.bf16.mxu0 0
  %457 = vmatpush1.bf16.msra.mxu0 0
  %458 = vmatprep.mubr.bf16.mxu0 0
  %459 = vmatmul.mubr.bf16.gmra.mrb[0].mxu0 %v418
  %v460 = vpop.f32.mrb[0].mxu0
  %v461 = vadd.f32 0.0, %v460
  %v462 = vpop.f32.mrb[0].mxu0
  %v463 = vpop.f32.mrb[0].mxu0
  %v464 = vadd.f32 0.0, %v463
  %v465 = vpop.f32.mrb[0].mxu0
  %466 = vmatprep.mubr.bf16.mxu0 0
  %467 = vmatmul.mubr.bf16.gmra.mrb[0].mxu0 %v421
  %v468 = vpop.f32.mrb[0].mxu0
  %v469 = vadd.f32 0.0, %v468
  %v470 = vpop.f32.mrb[0].mxu0
  %v471 = vpop.f32.mrb[0].mxu0
  %v472 = vadd.f32 0.0, %v471
  %v473 = vpop.f32.mrb[0].mxu0
  %474 = vmatprep.mubr.bf16.mxu0 0
  %475 = vmatmul.mubr.bf16.gmra.mrb[0].mxu0 %v424
  %v476 = vpop.f32.mrb[0].mxu0
  %v477 = vadd.f32 0.0, %v476
  %v478 = vpop.f32.mrb[0].mxu0
  %v479 = vpop.f32.mrb[0].mxu0
  %v480 = vadd.f32 0.0, %v479
  %v481 = vpop.f32.mrb[0].mxu0
  %482 = vdwg.mxu0
  %v483 = vadd.f32 %v222, %v461
  %v484 = vadd.f32 %v225, %v464
  %v485 = vadd.f32 %v230, %v469
  %v486 = vadd.f32 %v233, %v472
  %v487 = vadd.f32 %v238, %v477
  %v488 = vadd.f32 %v241, %v480
  %v489 = vtanh.pop %v483
  %v490 = vtanh.pop %v484
  %v491 = vtanh.pop %v485
  %v492 = vtanh.pop %v486
  %v493 = vtanh.pop %v487
  %v494 = vtanh.pop %v488
  %v495 = vadd.f32 %v489, 1.0
  %v496 = vadd.f32 %v490, 1.0
  %v497 = vadd.f32 %v491, 1.0
  %v498 = vadd.f32 %v492, 1.0
  %v499 = vadd.f32 %v493, 1.0
  %v500 = vadd.f32 %v494, 1.0
  %v501 = vmul.f32 %v495, 0.5
  %v502 = vmul.f32 %v496, 0.5
  %v503 = vmul.f32 %v497, 0.5
  %v504 = vmul.f32 %v498, 0.5
  %v505 = vmul.f32 %v499, 0.5
  %v506 = vmul.f32 %v500, 0.5
  %v507 = vmul.f32 %v501, %v350
  %v508 = vmul.f32 %v502, %v351
  %v509 = vmul.f32 %v503, %v352
  %v510 = vmul.f32 %v504, %v353
  %v511 = vmul.f32 %v505, %v354
  %v512 = vmul.f32 %v506, %v355
  %519 = vrot.lane.b32.xlu0 %v489, 64
  %v520 = vpop.permute.xlu0 %519
  %521 = vrot.lane.b32.xlu0 %v490, 64
  %v522 = vpop.permute.xlu0 %521
  %523 = vrot.lane.b32.xlu0 %v491, 64
  %v524 = vpop.permute.xlu0 %523
  %525 = vrot.lane.b32.xlu0 %v492, 64
  %v526 = vpop.permute.xlu0 %525
  %527 = vrot.lane.b32.xlu0 %v493, 64
  %v528 = vpop.permute.xlu0 %527
  %529 = vrot.lane.b32.xlu0 %v494, 64
  %v530 = vpop.permute.xlu0 %529
  %v537 = vmul.f32 %v501, %v520
  %v538 = vmul.f32 %v502, %v522
  %v539 = vmul.f32 %v503, %v524
  %v540 = vmul.f32 %v504, %v526
  %v541 = vmul.f32 %v505, %v528
  %v542 = vmul.f32 %v506, %v530
  %549 = vrot.lane.b32.xlu0 %v537, 32
  %v550 = vpop.permute.xlu0 %549
  %551 = vrot.lane.b32.xlu0 %v538, 32
  %v552 = vpop.permute.xlu0 %551
  %553 = vrot.lane.b32.xlu0 %v539, 32
  %v554 = vpop.permute.xlu0 %553
  %555 = vrot.lane.b32.xlu0 %v540, 32
  %v556 = vpop.permute.xlu0 %555
  %557 = vrot.lane.b32.xlu0 %v541, 32
  %v558 = vpop.permute.xlu0 %557
  %559 = vrot.lane.b32.xlu0 %v542, 32
  %v560 = vpop.permute.xlu0 %559
  %v567 = vadd.f32 %v507, %v550
  %v568 = vadd.f32 %v508, %v552
  %v569 = vadd.f32 %v509, %v554
  %v570 = vadd.f32 %v510, %v556
  %v571 = vadd.f32 %v511, %v558
  %v572 = vadd.f32 %v512, %v560
  %v573 = vtanh.pop %v567
  %v574 = vtanh.pop %v568
  %v575 = vtanh.pop %v569
  %v576 = vtanh.pop %v570
  %v577 = vtanh.pop %v571
  %v578 = vtanh.pop %v572
  %585 = vrot.lane.b32.xlu0 %v573, 64
  %v586 = vpop.permute.xlu0 %585
  %587 = vrot.lane.b32.xlu0 %v574, 64
  %v588 = vpop.permute.xlu0 %587
  %589 = vrot.lane.b32.xlu0 %v575, 64
  %v590 = vpop.permute.xlu0 %589
  %591 = vrot.lane.b32.xlu0 %v576, 64
  %v592 = vpop.permute.xlu0 %591
  %593 = vrot.lane.b32.xlu0 %v577, 64
  %v594 = vpop.permute.xlu0 %593
  %595 = vrot.lane.b32.xlu0 %v578, 64
  %v596 = vpop.permute.xlu0 %595
  %v603 = vmul.f32 %v501, %v586
  %v604 = vmul.f32 %v502, %v588
  %v605 = vmul.f32 %v503, %v590
  %v606 = vmul.f32 %v504, %v592
  %v607 = vmul.f32 %v505, %v594
  %v608 = vmul.f32 %v506, %v596
  %v609 = vpack.c.bf16 %v604, %v603
  %v610 = vpack.c.bf16 %v606, %v605
  %v611 = vpack.c.bf16 %v608, %v607
  %615 = vrot.lane.b32.xlu0 %v609, 32
  %v616 = vpop.permute.xlu0 %615
  %617 = vrot.lane.b32.xlu0 %v610, 32
  %v618 = vpop.permute.xlu0 %617
  %619 = vrot.lane.b32.xlu0 %v611, 32
  %v620 = vpop.permute.xlu0 %619
  %v622 = vsel %vm416, %v616, 0
  %v625 = vsel %vm416, %v618, 0
  %v628 = vsel %vm416, %v620, 0
  %630 = vmatprep.subr.bf16.mxu0 0
  %631 = vmatpush1.bf16.msra.mxu0 %v412
  %632 = vmatprep.subr.bf16.mxu0 0
  %633 = vmatpush1.bf16.msra.mxu0 %v413
  %634 = vmatprep.subr.bf16.mxu0 0
  %635 = vmatpush1.bf16.msra.mxu0 0
  %636 = vmatprep.subr.bf16.mxu0 0
  %637 = vmatpush1.bf16.msra.mxu0 0
  %638 = vmatprep.subr.bf16.mxu0 0
  %639 = vmatpush1.bf16.msra.mxu0 0
  %640 = vmatprep.subr.bf16.mxu0 0
  %641 = vmatpush1.bf16.msra.mxu0 0
  %642 = vmatprep.subr.bf16.mxu0 0
  %643 = vmatpush1.bf16.msra.mxu0 0
  %644 = vmatprep.subr.bf16.mxu0 0
  %645 = vmatpush1.bf16.msra.mxu0 0
  %646 = vmatprep.subr.bf16.mxu0 0
  %647 = vmatpush1.bf16.msra.mxu0 0
  %648 = vmatprep.subr.bf16.mxu0 0
  %649 = vmatpush1.bf16.msra.mxu0 0
  %650 = vmatprep.subr.bf16.mxu0 0
  %651 = vmatpush1.bf16.msra.mxu0 0
  %652 = vmatprep.subr.bf16.mxu0 0
  %653 = vmatpush1.bf16.msra.mxu0 0
  %654 = vmatprep.subr.bf16.mxu0 0
  %655 = vmatpush1.bf16.msra.mxu0 0
  %656 = vmatprep.subr.bf16.mxu0 0
  %657 = vmatpush1.bf16.msra.mxu0 0
  %658 = vmatprep.subr.bf16.mxu0 0
  %659 = vmatpush1.bf16.msra.mxu0 0
  %660 = vmatprep.subr.bf16.mxu0 0
  %661 = vmatpush1.bf16.msra.mxu0 0
  %662 = vmatprep.mubr.bf16.mxu0 0
  %663 = vmatmul.mubr.bf16.gmra.mrb[0].mxu0 %v622
  %v664 = vpop.f32.mrb[0].mxu0
  %v665 = vadd.f32 0.0, %v664
  %v666 = vpop.f32.mrb[0].mxu0
  %v667 = vpop.f32.mrb[0].mxu0
  %v668 = vadd.f32 0.0, %v667
  %v669 = vpop.f32.mrb[0].mxu0
  %670 = vmatprep.mubr.bf16.mxu0 0
  %671 = vmatmul.mubr.bf16.gmra.mrb[0].mxu0 %v625
  %v672 = vpop.f32.mrb[0].mxu0
  %v673 = vadd.f32 0.0, %v672
  %v674 = vpop.f32.mrb[0].mxu0
  %v675 = vpop.f32.mrb[0].mxu0
  %v676 = vadd.f32 0.0, %v675
  %v677 = vpop.f32.mrb[0].mxu0
  %678 = vmatprep.mubr.bf16.mxu0 0
  %679 = vmatmul.mubr.bf16.gmra.mrb[0].mxu0 %v628
  %v680 = vpop.f32.mrb[0].mxu0
  %v681 = vadd.f32 0.0, %v680
  %v682 = vpop.f32.mrb[0].mxu0
  %v683 = vpop.f32.mrb[0].mxu0
  %v684 = vadd.f32 0.0, %v683
  %v685 = vpop.f32.mrb[0].mxu0
  %686 = vdwg.mxu0
  %v687 = vadd.f32 %v246, %v665
  %v688 = vadd.f32 %v249, %v668
  %v689 = vadd.f32 %v254, %v673
  %v690 = vadd.f32 %v257, %v676
  %v691 = vadd.f32 %v262, %v681
  %v692 = vadd.f32 %v265, %v684
  %v693 = vtanh.pop %v687
  %v694 = vtanh.pop %v688
  %v695 = vtanh.pop %v689
  %v696 = vtanh.pop %v690
  %v697 = vtanh.pop %v691
  %v698 = vtanh.pop %v692
  %v699 = vadd.f32 %v693, 1.0
  %v700 = vadd.f32 %v694, 1.0
  %v701 = vadd.f32 %v695, 1.0
  %v702 = vadd.f32 %v696, 1.0
  %v703 = vadd.f32 %v697, 1.0
  %v704 = vadd.f32 %v698, 1.0
  %v705 = vmul.f32 %v699, 0.5
  %v706 = vmul.f32 %v700, 0.5
  %v707 = vmul.f32 %v701, 0.5
  %v708 = vmul.f32 %v702, 0.5
  %v709 = vmul.f32 %v703, 0.5
  %v710 = vmul.f32 %v704, 0.5
  %v711 = vmul.f32 %v705, %v567
  %v712 = vmul.f32 %v706, %v568
  %v713 = vmul.f32 %v707, %v569
  %v714 = vmul.f32 %v708, %v570
  %v715 = vmul.f32 %v709, %v571
  %v716 = vmul.f32 %v710, %v572
  %723 = vrot.lane.b32.xlu0 %v693, 64
  %v724 = vpop.permute.xlu0 %723
  %725 = vrot.lane.b32.xlu0 %v694, 64
  %v726 = vpop.permute.xlu0 %725
  %727 = vrot.lane.b32.xlu0 %v695, 64
  %v728 = vpop.permute.xlu0 %727
  %729 = vrot.lane.b32.xlu0 %v696, 64
  %v730 = vpop.permute.xlu0 %729
  %731 = vrot.lane.b32.xlu0 %v697, 64
  %v732 = vpop.permute.xlu0 %731
  %733 = vrot.lane.b32.xlu0 %v698, 64
  %v734 = vpop.permute.xlu0 %733
  %v741 = vmul.f32 %v705, %v724
  %v742 = vmul.f32 %v706, %v726
  %v743 = vmul.f32 %v707, %v728
  %v744 = vmul.f32 %v708, %v730
  %v745 = vmul.f32 %v709, %v732
  %v746 = vmul.f32 %v710, %v734
  %753 = vrot.lane.b32.xlu0 %v741, 32
  %v754 = vpop.permute.xlu0 %753
  %755 = vrot.lane.b32.xlu0 %v742, 32
  %v756 = vpop.permute.xlu0 %755
  %757 = vrot.lane.b32.xlu0 %v743, 32
  %v758 = vpop.permute.xlu0 %757
  %759 = vrot.lane.b32.xlu0 %v744, 32
  %v760 = vpop.permute.xlu0 %759
  %761 = vrot.lane.b32.xlu0 %v745, 32
  %v762 = vpop.permute.xlu0 %761
  %763 = vrot.lane.b32.xlu0 %v746, 32
  %v764 = vpop.permute.xlu0 %763
  %v771 = vadd.f32 %v711, %v754
  %v772 = vadd.f32 %v712, %v756
  %v773 = vadd.f32 %v713, %v758
  %v774 = vadd.f32 %v714, %v760
  %v775 = vadd.f32 %v715, %v762
  %v776 = vadd.f32 %v716, %v764
  %v777 = vtanh.pop %v771
  %v778 = vtanh.pop %v772
  %v779 = vtanh.pop %v773
  %v780 = vtanh.pop %v774
  %v781 = vtanh.pop %v775
  %v782 = vtanh.pop %v776
  %789 = vrot.lane.b32.xlu0 %v777, 64
  %v790 = vpop.permute.xlu0 %789
  %791 = vrot.lane.b32.xlu0 %v778, 64
  %v792 = vpop.permute.xlu0 %791
  %793 = vrot.lane.b32.xlu0 %v779, 64
  %v794 = vpop.permute.xlu0 %793
  %795 = vrot.lane.b32.xlu0 %v780, 64
  %v796 = vpop.permute.xlu0 %795
  %797 = vrot.lane.b32.xlu0 %v781, 64
  %v798 = vpop.permute.xlu0 %797
  %799 = vrot.lane.b32.xlu0 %v782, 64
  %v800 = vpop.permute.xlu0 %799
  %v807 = vmul.f32 %v705, %v790
  %v808 = vmul.f32 %v706, %v792
  %v809 = vmul.f32 %v707, %v794
  %v810 = vmul.f32 %v708, %v796
  %v811 = vmul.f32 %v709, %v798
  %v812 = vmul.f32 %v710, %v800
  %v813 = vld [vmem:[%s0] sm:$0xf]
  %v814 = vld [vmem:[%s0 + $0x4] sm:$0xf]
  %v815 = vld [vmem:[%s0 + $0x8] sm:$0xf]
  %v816 = vld [vmem:[%s0 + $0xc] sm:$0xf]
  %v817 = vld [vmem:[%s4] sm:$0xf]
  %v818 = vld [vmem:[%s4 + $0x4] sm:$0xf]
  %v819 = vpack.c.bf16 %v810, %v809
  %v820 = vpack.c.bf16 %v812, %v811
  %v821 = vld [vmem:[%s5] sm:$0xf]
  %v822 = vld [vmem:[%s5 + $0x4] sm:$0xf]
  %v823 = vld [vmem:[%s5 + $0x8] sm:$0xf]
  %v824 = vld [vmem:[%s5 + $0xc] sm:$0xf]
  %827 = vrot.lane.b32.xlu0 %v819, 32
  %v828 = vpop.permute.xlu0 %827
  %829 = vrot.lane.b32.xlu0 %v820, 32
  %v830 = vpop.permute.xlu0 %829
  %v835 = vunpack.c.l.b16 %v821
  %v836 = vunpack.c.l.b16 %v822
  %v837 = vunpack.c.l.b16 %v823
  %v838 = vunpack.c.l.b16 %v824
  %v839 = vpack.c.b16 %v836, %v835
  %v840 = vpack.c.b16 %v838, %v837
  %v844 = vsel %vm416, %v828, 0
  %v847 = vsel %vm416, %v830, 0
  %849 = vmatprep.subr.bf16.mxu0 0
  %850 = vmatpush1.bf16.msra.mxu0 %v839
  %851 = vmatprep.subr.bf16.mxu0 0
  %852 = vmatpush1.bf16.msra.mxu0 %v840
  %853 = vmatprep.subr.bf16.mxu0 0
  %854 = vmatpush1.bf16.msra.mxu0 0
  %855 = vmatprep.subr.bf16.mxu0 0
  %856 = vmatpush1.bf16.msra.mxu0 0
  %857 = vmatprep.subr.bf16.mxu0 0
  %858 = vmatpush1.bf16.msra.mxu0 0
  %859 = vmatprep.subr.bf16.mxu0 0
  %860 = vmatpush1.bf16.msra.mxu0 0
  %861 = vmatprep.subr.bf16.mxu0 0
  %862 = vmatpush1.bf16.msra.mxu0 0
  %863 = vmatprep.subr.bf16.mxu0 0
  %864 = vmatpush1.bf16.msra.mxu0 0
  %865 = vmatprep.subr.bf16.mxu0 0
  %866 = vmatpush1.bf16.msra.mxu0 0
  %867 = vmatprep.subr.bf16.mxu0 0
  %868 = vmatpush1.bf16.msra.mxu0 0
  %869 = vmatprep.subr.bf16.mxu0 0
  %870 = vmatpush1.bf16.msra.mxu0 0
  %871 = vmatprep.subr.bf16.mxu0 0
  %872 = vmatpush1.bf16.msra.mxu0 0
  %873 = vmatprep.subr.bf16.mxu0 0
  %874 = vmatpush1.bf16.msra.mxu0 0
  %875 = vmatprep.subr.bf16.mxu0 0
  %876 = vmatpush1.bf16.msra.mxu0 0
  %877 = vmatprep.subr.bf16.mxu0 0
  %878 = vmatpush1.bf16.msra.mxu0 0
  %879 = vmatprep.subr.bf16.mxu0 0
  %880 = vmatpush1.bf16.msra.mxu0 0
  %881 = vmatprep.mubr.bf16.mxu0 0
  %882 = vmatmul.mubr.bf16.gmra.mrb[0].mxu0 %v844
  %v883 = vpop.f32.mrb[0].mxu0
  %v884 = vadd.f32 0.0, %v883
  %v885 = vpop.f32.mrb[0].mxu0
  %v886 = vpop.f32.mrb[0].mxu0
  %v887 = vadd.f32 0.0, %v886
  %v888 = vpop.f32.mrb[0].mxu0
  %889 = vmatprep.mubr.bf16.mxu0 0
  %890 = vmatmul.mubr.bf16.gmra.mrb[0].mxu0 %v847
  %v891 = vpop.f32.mrb[0].mxu0
  %v892 = vadd.f32 0.0, %v891
  %v893 = vpop.f32.mrb[0].mxu0
  %v894 = vpop.f32.mrb[0].mxu0
  %v895 = vadd.f32 0.0, %v894
  %v896 = vpop.f32.mrb[0].mxu0
  %897 = vdwg.mxu0
  %v902 = vunpack.c.l.b16 %v813
  %v903 = vunpack.c.l.b16 %v814
  %v904 = vunpack.c.l.b16 %v815
  %v905 = vunpack.c.l.b16 %v816
  %v906 = vpack.c.b16 %v903, %v902
  %v907 = vpack.c.b16 %v905, %v904
  %v910 = vunpack.c.l.b16 %v817
  %v911 = vunpack.c.l.b16 %v818
  %v912 = vpack.c.b16 %v911, %v910
  %v915 = vsel %vm135, %v906, 0
  %v918 = vsel %vm135, %v907, 0
  %920 = vmatprep.subr.bf16.mxu0 0
  %921 = vmatpush1.bf16.msra.mxu0 %v912
  %922 = vmatprep.subr.bf16.mxu0 0
  %923 = vmatpush1.bf16.msra.mxu0 0
  %924 = vmatprep.subr.bf16.mxu0 0
  %925 = vmatpush1.bf16.msra.mxu0 0
  %926 = vmatprep.subr.bf16.mxu0 0
  %927 = vmatpush1.bf16.msra.mxu0 0
  %928 = vmatprep.subr.bf16.mxu0 0
  %929 = vmatpush1.bf16.msra.mxu0 0
  %930 = vmatprep.subr.bf16.mxu0 0
  %931 = vmatpush1.bf16.msra.mxu0 0
  %932 = vmatprep.subr.bf16.mxu0 0
  %933 = vmatpush1.bf16.msra.mxu0 0
  %934 = vmatprep.subr.bf16.mxu0 0
  %935 = vmatpush1.bf16.msra.mxu0 0
  %936 = vmatprep.subr.bf16.mxu0 0
  %937 = vmatpush1.bf16.msra.mxu0 0
  %938 = vmatprep.subr.bf16.mxu0 0
  %939 = vmatpush1.bf16.msra.mxu0 0
  %940 = vmatprep.subr.bf16.mxu0 0
  %941 = vmatpush1.bf16.msra.mxu0 0
  %942 = vmatprep.subr.bf16.mxu0 0
  %943 = vmatpush1.bf16.msra.mxu0 0
  %944 = vmatprep.subr.bf16.mxu0 0
  %945 = vmatpush1.bf16.msra.mxu0 0
  %946 = vmatprep.subr.bf16.mxu0 0
  %947 = vmatpush1.bf16.msra.mxu0 0
  %948 = vmatprep.subr.bf16.mxu0 0
  %949 = vmatpush1.bf16.msra.mxu0 0
  %950 = vmatprep.subr.bf16.mxu0 0
  %951 = vmatpush1.bf16.msra.mxu0 0
  %952 = vmatprep.mubr.bf16.mxu0 0
  %953 = vmatmul.mubr.bf16.gmra.mrb[0].mxu0 %v915
  %v954 = vpop.f32.mrb[0].mxu0
  %v955 = vadd.f32 %v884, %v954
  %v956 = vpop.f32.mrb[0].mxu0
  %v957 = vpop.f32.mrb[0].mxu0
  %v958 = vadd.f32 %v887, %v957
  %v959 = vpop.f32.mrb[0].mxu0
  %960 = vmatprep.mubr.bf16.mxu0 0
  %961 = vmatmul.mubr.bf16.gmra.mrb[0].mxu0 %v918
  %v962 = vpop.f32.mrb[0].mxu0
  %v963 = vadd.f32 %v892, %v962
  %v964 = vpop.f32.mrb[0].mxu0
  %v965 = vpop.f32.mrb[0].mxu0
  %v966 = vadd.f32 %v895, %v965
  %v967 = vpop.f32.mrb[0].mxu0
  %968 = vdwg.mxu0
  %v969 = vld [vmem:[%s7] sm:$0x1]
  %v971 = vlaneseq
  %v972 = vshrl.u32 %v971, 7
  %v973 = vsub.s32 0, %v972
  %v974 = vrot.slane %v969, %v973
  %v976 = vadd.f32 %v955, %v974
  %v977 = vadd.f32 %v958, %v974
  %v978 = vadd.f32 %v963, %v974
  %v979 = vadd.f32 %v966, %v974
  %v980 = vld [vmem:[%s6] sm:$0xf]
  %v981 = vld [vmem:[%s6 + $0x4] sm:$0xf]
  %v982 = vld [vmem:[%s6 + $0x8] sm:$0xf]
  %v983 = vld [vmem:[%s6 + $0xc] sm:$0xf]
  %v984 = vtanh.pop %v976
  %v985 = vtanh.pop %v977
  %v986 = vadd.f32 %v984, 1.0
  %v987 = vadd.f32 %v985, 1.0
  %v988 = vmul.f32 %v986, 0.5
  %v989 = vmul.f32 %v987, 0.5
  %v990 = vmul.f32 %v988, 0.0
  %v991 = vmul.f32 %v989, 0.0
  %994 = vrot.lane.b32.xlu0 %v984, 64
  %v995 = vpop.permute.xlu0 %994
  %996 = vrot.lane.b32.xlu0 %v985, 64
  %v997 = vpop.permute.xlu0 %996
  %v1000 = vmul.f32 %v988, %v995
  %v1001 = vmul.f32 %v989, %v997
  %1004 = vrot.lane.b32.xlu0 %v1000, 32
  %v1005 = vpop.permute.xlu0 %1004
  %1006 = vrot.lane.b32.xlu0 %v1001, 32
  %v1007 = vpop.permute.xlu0 %1006
  %v1010 = vadd.f32 %v990, %v1005
  %v1011 = vadd.f32 %v991, %v1007
  %v1012 = vtanh.pop %v1010
  %v1013 = vtanh.pop %v1011
  %1016 = vrot.lane.b32.xlu0 %v1012, 64
  %v1017 = vpop.permute.xlu0 %1016
  %1018 = vrot.lane.b32.xlu0 %v1013, 64
  %v1019 = vpop.permute.xlu0 %1018
  %v1022 = vmul.f32 %v988, %v1017
  %v1023 = vmul.f32 %v989, %v1019
  %v1024 = vpack.c.bf16 %v1023, %v1022
  %1026 = vrot.lane.b32.xlu0 %v1024, 32
  %v1027 = vpop.permute.xlu0 %1026
  %v1032 = vunpack.c.l.b16 %v980
  %v1033 = vunpack.c.l.b16 %v981
  %v1034 = vunpack.c.l.b16 %v982
  %v1035 = vunpack.c.l.b16 %v983
  %v1036 = vpack.c.b16 %v1033, %v1032
  %v1037 = vpack.c.b16 %v1035, %v1034
  %v1041 = vsel %vm416, %v1027, 0
  %1043 = vmatprep.subr.bf16.mxu0 0
  %1044 = vmatpush1.bf16.msra.mxu0 %v1036
  %1045 = vmatprep.subr.bf16.mxu0 0
  %1046 = vmatpush1.bf16.msra.mxu0 %v1037
  %1047 = vmatprep.subr.bf16.mxu0 0
  %1048 = vmatpush1.bf16.msra.mxu0 0
  %1049 = vmatprep.subr.bf16.mxu0 0
  %1050 = vmatpush1.bf16.msra.mxu0 0
  %1051 = vmatprep.subr.bf16.mxu0 0
  %1052 = vmatpush1.bf16.msra.mxu0 0
  %1053 = vmatprep.subr.bf16.mxu0 0
  %1054 = vmatpush1.bf16.msra.mxu0 0
  %1055 = vmatprep.subr.bf16.mxu0 0
  %1056 = vmatpush1.bf16.msra.mxu0 0
  %1057 = vmatprep.subr.bf16.mxu0 0
  %1058 = vmatpush1.bf16.msra.mxu0 0
  %1059 = vmatprep.subr.bf16.mxu0 0
  %1060 = vmatpush1.bf16.msra.mxu0 0
  %1061 = vmatprep.subr.bf16.mxu0 0
  %1062 = vmatpush1.bf16.msra.mxu0 0
  %1063 = vmatprep.subr.bf16.mxu0 0
  %1064 = vmatpush1.bf16.msra.mxu0 0
  %1065 = vmatprep.subr.bf16.mxu0 0
  %1066 = vmatpush1.bf16.msra.mxu0 0
  %1067 = vmatprep.subr.bf16.mxu0 0
  %1068 = vmatpush1.bf16.msra.mxu0 0
  %1069 = vmatprep.subr.bf16.mxu0 0
  %1070 = vmatpush1.bf16.msra.mxu0 0
  %1071 = vmatprep.subr.bf16.mxu0 0
  %1072 = vmatpush1.bf16.msra.mxu0 0
  %1073 = vmatprep.subr.bf16.mxu0 0
  %1074 = vmatpush1.bf16.msra.mxu0 0
  %1075 = vmatprep.mubr.bf16.mxu0 0
  %1076 = vmatmul.mubr.bf16.gmra.mrb[0].mxu0 %v1041
  %v1077 = vpop.f32.mrb[0].mxu0
  %v1078 = vadd.f32 0.0, %v1077
  %v1079 = vpop.f32.mrb[0].mxu0
  %v1080 = vpop.f32.mrb[0].mxu0
  %v1081 = vadd.f32 0.0, %v1080
  %v1082 = vpop.f32.mrb[0].mxu0
  %1083 = vdwg.mxu0
  %v1084 = vadd.f32 %v978, %v1078
  %v1085 = vadd.f32 %v979, %v1081
  %v1086 = vtanh.pop %v1084
  %v1087 = vtanh.pop %v1085
  %v1088 = vadd.f32 %v1086, 1.0
  %v1089 = vadd.f32 %v1087, 1.0
  %v1090 = vmul.f32 %v1088, 0.5
  %v1091 = vmul.f32 %v1089, 0.5
  %v1092 = vmul.f32 %v1090, %v1010
  %v1093 = vmul.f32 %v1091, %v1011
  %1096 = vrot.lane.b32.xlu0 %v1086, 64
  %v1097 = vpop.permute.xlu0 %1096
  %1098 = vrot.lane.b32.xlu0 %v1087, 64
  %v1099 = vpop.permute.xlu0 %1098
  %v1102 = vmul.f32 %v1090, %v1097
  %v1103 = vmul.f32 %v1091, %v1099
  %1106 = vrot.lane.b32.xlu0 %v1102, 32
  %v1107 = vpop.permute.xlu0 %1106
  %1108 = vrot.lane.b32.xlu0 %v1103, 32
  %v1109 = vpop.permute.xlu0 %1108
  %v1112 = vadd.f32 %v1092, %v1107
  %v1113 = vadd.f32 %v1093, %v1109
  %v1114 = vtanh.pop %v1112
  %v1115 = vtanh.pop %v1113
  %1118 = vrot.lane.b32.xlu0 %v1114, 64
  %v1119 = vpop.permute.xlu0 %1118
  %1120 = vrot.lane.b32.xlu0 %v1115, 64
  %v1121 = vpop.permute.xlu0 %1120
  %v1124 = vmul.f32 %v1090, %v1119
  %v1125 = vmul.f32 %v1091, %v1121
  %v1126 = vld [vmem:[%s8] sm:$0xf]
  %v1127 = vld [vmem:[%s8 + $0x4] sm:$0xf]
  %v1128 = vpack.c.bf16 %v1125, %v1124
  %v1129 = vld [vmem:[%s9] sm:$0xf]
  %v1130 = vld [vmem:[%s9 + $0x4] sm:$0xf]
  %v1131 = vld [vmem:[%s9 + $0x8] sm:$0xf]
  %v1132 = vld [vmem:[%s9 + $0xc] sm:$0xf]
  %1134 = vrot.lane.b32.xlu0 %v1128, 32
  %v1135 = vpop.permute.xlu0 %1134
  %v1140 = vunpack.c.l.b16 %v1129
  %v1141 = vunpack.c.l.b16 %v1130
  %v1142 = vunpack.c.l.b16 %v1131
  %v1143 = vunpack.c.l.b16 %v1132
  %v1144 = vpack.c.b16 %v1141, %v1140
  %v1145 = vpack.c.b16 %v1143, %v1142
  %v1149 = vsel %vm416, %v1135, 0
  %1151 = vmatprep.subr.bf16.mxu0 0
  %1152 = vmatpush1.bf16.msra.mxu0 %v1144
  %1153 = vmatprep.subr.bf16.mxu0 0
  %1154 = vmatpush1.bf16.msra.mxu0 %v1145
  %1155 = vmatprep.subr.bf16.mxu0 0
  %1156 = vmatpush1.bf16.msra.mxu0 0
  %1157 = vmatprep.subr.bf16.mxu0 0
  %1158 = vmatpush1.bf16.msra.mxu0 0
  %1159 = vmatprep.subr.bf16.mxu0 0
  %1160 = vmatpush1.bf16.msra.mxu0 0
  %1161 = vmatprep.subr.bf16.mxu0 0
  %1162 = vmatpush1.bf16.msra.mxu0 0
  %1163 = vmatprep.subr.bf16.mxu0 0
  %1164 = vmatpush1.bf16.msra.mxu0 0
  %1165 = vmatprep.subr.bf16.mxu0 0
  %1166 = vmatpush1.bf16.msra.mxu0 0
  %1167 = vmatprep.subr.bf16.mxu0 0
  %1168 = vmatpush1.bf16.msra.mxu0 0
  %1169 = vmatprep.subr.bf16.mxu0 0
  %1170 = vmatpush1.bf16.msra.mxu0 0
  %1171 = vmatprep.subr.bf16.mxu0 0
  %1172 = vmatpush1.bf16.msra.mxu0 0
  %1173 = vmatprep.subr.bf16.mxu0 0
  %1174 = vmatpush1.bf16.msra.mxu0 0
  %1175 = vmatprep.subr.bf16.mxu0 0
  %1176 = vmatpush1.bf16.msra.mxu0 0
  %1177 = vmatprep.subr.bf16.mxu0 0
  %1178 = vmatpush1.bf16.msra.mxu0 0
  %1179 = vmatprep.subr.bf16.mxu0 0
  %1180 = vmatpush1.bf16.msra.mxu0 0
  %1181 = vmatprep.subr.bf16.mxu0 0
  %1182 = vmatpush1.bf16.msra.mxu0 0
  %1183 = vmatprep.mubr.bf16.mxu0 0
  %1184 = vmatmul.mubr.bf16.gmra.mrb[0].mxu0 %v1149
  %v1185 = vpop.f32.mrb[0].mxu0
  %v1186 = vadd.f32 0.0, %v1185
  %v1187 = vpop.f32.mrb[0].mxu0
  %v1188 = vpop.f32.mrb[0].mxu0
  %v1189 = vadd.f32 0.0, %v1188
  %v1190 = vpop.f32.mrb[0].mxu0
  %1191 = vdwg.mxu0
  %v1194 = vunpack.c.l.b16 %v1126
  %v1195 = vunpack.c.l.b16 %v1127
  %v1196 = vpack.c.b16 %v1195, %v1194
  %1198 = vmatprep.subr.bf16.mxu0 0
  %1199 = vmatpush1.bf16.msra.mxu0 %v1196
  %1200 = vmatprep.subr.bf16.mxu0 0
  %1201 = vmatpush1.bf16.msra.mxu0 0
  %1202 = vmatprep.subr.bf16.mxu0 0
  %1203 = vmatpush1.bf16.msra.mxu0 0
  %1204 = vmatprep.subr.bf16.mxu0 0
  %1205 = vmatpush1.bf16.msra.mxu0 0
  %1206 = vmatprep.subr.bf16.mxu0 0
  %1207 = vmatpush1.bf16.msra.mxu0 0
  %1208 = vmatprep.subr.bf16.mxu0 0
  %1209 = vmatpush1.bf16.msra.mxu0 0
  %1210 = vmatprep.subr.bf16.mxu0 0
  %1211 = vmatpush1.bf16.msra.mxu0 0
  %1212 = vmatprep.subr.bf16.mxu0 0
  %1213 = vmatpush1.bf16.msra.mxu0 0
  %1214 = vmatprep.subr.bf16.mxu0 0
  %1215 = vmatpush1.bf16.msra.mxu0 0
  %1216 = vmatprep.subr.bf16.mxu0 0
  %1217 = vmatpush1.bf16.msra.mxu0 0
  %1218 = vmatprep.subr.bf16.mxu0 0
  %1219 = vmatpush1.bf16.msra.mxu0 0
  %1220 = vmatprep.subr.bf16.mxu0 0
  %1221 = vmatpush1.bf16.msra.mxu0 0
  %1222 = vmatprep.subr.bf16.mxu0 0
  %1223 = vmatpush1.bf16.msra.mxu0 0
  %1224 = vmatprep.subr.bf16.mxu0 0
  %1225 = vmatpush1.bf16.msra.mxu0 0
  %1226 = vmatprep.subr.bf16.mxu0 0
  %1227 = vmatpush1.bf16.msra.mxu0 0
  %1228 = vmatprep.subr.bf16.mxu0 0
  %1229 = vmatpush1.bf16.msra.mxu0 0
  %1230 = vmatprep.mubr.bf16.mxu0 0
  %1231 = vmatmul.mubr.bf16.gmra.mrb[0].mxu0 %v915
  %v1232 = vpop.f32.mrb[0].mxu0
  %v1233 = vadd.f32 %v1186, %v1232
  %v1234 = vpop.f32.mrb[0].mxu0
  %v1235 = vpop.f32.mrb[0].mxu0
  %v1236 = vadd.f32 %v1189, %v1235
  %v1237 = vpop.f32.mrb[0].mxu0
  %1238 = vdwg.mxu0
  %v1239 = vpack.c.bf16 %v808, %v807
  %v1240 = vld [vmem:[%s10] sm:$0xf]
  %v1241 = vld [vmem:[%s10 + $0x4] sm:$0xf]
  %v1242 = vld [vmem:[%s10 + $0x8] sm:$0xf]
  %v1243 = vld [vmem:[%s10 + $0xc] sm:$0xf]
  %1245 = vrot.lane.b32.xlu0 %v1239, 32
  %v1246 = vpop.permute.xlu0 %1245
  %v1251 = vunpack.c.l.b16 %v1240
  %v1252 = vunpack.c.l.b16 %v1241
  %v1253 = vunpack.c.l.b16 %v1242
  %v1254 = vunpack.c.l.b16 %v1243
  %v1255 = vpack.c.b16 %v1252, %v1251
  %v1256 = vpack.c.b16 %v1254, %v1253
  %v1260 = vsel %vm416, %v1246, 0
  %1262 = vmatprep.subr.bf16.mxu0 0
  %1263 = vmatpush1.bf16.msra.mxu0 %v1255
  %1264 = vmatprep.subr.bf16.mxu0 0
  %1265 = vmatpush1.bf16.msra.mxu0 %v1256
  %1266 = vmatprep.subr.bf16.mxu0 0
  %1267 = vmatpush1.bf16.msra.mxu0 0
  %1268 = vmatprep.subr.bf16.mxu0 0
  %1269 = vmatpush1.bf16.msra.mxu0 0
  %1270 = vmatprep.subr.bf16.mxu0 0
  %1271 = vmatpush1.bf16.msra.mxu0 0
  %1272 = vmatprep.subr.bf16.mxu0 0
  %1273 = vmatpush1.bf16.msra.mxu0 0
  %1274 = vmatprep.subr.bf16.mxu0 0
  %1275 = vmatpush1.bf16.msra.mxu0 0
  %1276 = vmatprep.subr.bf16.mxu0 0
  %1277 = vmatpush1.bf16.msra.mxu0 0
  %1278 = vmatprep.subr.bf16.mxu0 0
  %1279 = vmatpush1.bf16.msra.mxu0 0
  %1280 = vmatprep.subr.bf16.mxu0 0
  %1281 = vmatpush1.bf16.msra.mxu0 0
  %1282 = vmatprep.subr.bf16.mxu0 0
  %1283 = vmatpush1.bf16.msra.mxu0 0
  %1284 = vmatprep.subr.bf16.mxu0 0
  %1285 = vmatpush1.bf16.msra.mxu0 0
  %1286 = vmatprep.subr.bf16.mxu0 0
  %1287 = vmatpush1.bf16.msra.mxu0 0
  %1288 = vmatprep.subr.bf16.mxu0 0
  %1289 = vmatpush1.bf16.msra.mxu0 0
  %1290 = vmatprep.subr.bf16.mxu0 0
  %1291 = vmatpush1.bf16.msra.mxu0 0
  %1292 = vmatprep.subr.bf16.mxu0 0
  %1293 = vmatpush1.bf16.msra.mxu0 0
  %1294 = vmatprep.mubr.bf16.mxu0 0
  %1295 = vmatmul.mubr.bf16.gmra.mrb[0].mxu0 %v1260
  %v1296 = vpop.f32.mrb[0].mxu0
  %v1297 = vadd.f32 0.0, %v1296
  %v1298 = vpop.f32.mrb[0].mxu0
  %v1299 = vpop.f32.mrb[0].mxu0
  %v1300 = vadd.f32 0.0, %v1299
  %v1301 = vpop.f32.mrb[0].mxu0
  %1302 = vdwg.mxu0
  %v1303 = vadd.f32 %v1233, %v1297
  %v1304 = vadd.f32 %v1236, %v1300
  %v1305 = vld [vmem:[%s11] sm:$0x1]
  %v1307 = vlaneseq
  %v1308 = vshrl.u32 %v1307, 7
  %v1309 = vsub.s32 0, %v1308
  %v1310 = vrot.slane %v1305, %v1309
  %v1312 = vadd.f32 %v1303, %v1310
  %v1313 = vadd.f32 %v1304, %v1310
  %v1314 = vmax.f32 %v1312, 0.0
  %v1315 = vmax.f32 %v1313, 0.0
  %v1316 = vpack.c.bf16 %v1315, %v1314
  %v1317 = vld [vmem:[%s12] sm:$0xf]
  %v1318 = vld [vmem:[%s12 + $0x4] sm:$0xf]
  %v1319 = vld [vmem:[%s12 + $0x8] sm:$0xf]
  %v1320 = vld [vmem:[%s12 + $0xc] sm:$0xf]
  %v1321 = vld [vmem:[%s12 + $0x10] sm:$0xf]
  %v1322 = vld [vmem:[%s12 + $0x14] sm:$0xf]
  %v1323 = vld [vmem:[%s12 + $0x18] sm:$0xf]
  %v1324 = vld [vmem:[%s12 + $0x1c] sm:$0xf]
  %v1325 = vld [vmem:[%s13] sm:$0x1]
  %v1327 = vlaneseq
  %v1328 = vshrl.u32 %v1327, 7
  %v1329 = vsub.s32 0, %v1328
  %v1330 = vrot.slane %v1325, %v1329
  %v1340 = vunpack.c.l.b16 %v1317
  %v1341 = vunpack.c.l.b16 %v1318
  %v1342 = vunpack.c.l.b16 %v1319
  %v1343 = vunpack.c.l.b16 %v1320
  %v1344 = vunpack.c.l.b16 %v1321
  %v1345 = vunpack.c.l.b16 %v1322
  %v1346 = vunpack.c.l.b16 %v1323
  %v1347 = vunpack.c.l.b16 %v1324
  %v1348 = vpack.c.b16 %v1341, %v1340
  %v1349 = vpack.c.b16 %v1343, %v1342
  %v1350 = vpack.c.b16 %v1345, %v1344
  %v1351 = vpack.c.b16 %v1347, %v1346
  %vm1356 = vcmask 523264
  %v1358 = vsel %vm1356, %v1316, 0
  %1360 = vmatprep.subr.bf16.mxu0 0
  %1361 = vmatpush1.bf16.msra.mxu0 %v1348
  %1362 = vmatprep.subr.bf16.mxu0 0
  %1363 = vmatpush1.bf16.msra.mxu0 %v1349
  %1364 = vmatprep.subr.bf16.mxu0 0
  %1365 = vmatpush1.bf16.msra.mxu0 %v1350
  %1366 = vmatprep.subr.bf16.mxu0 0
  %1367 = vmatpush1.bf16.msra.mxu0 %v1351
  %1368 = vmatprep.subr.bf16.mxu0 0
  %1369 = vmatpush1.bf16.msra.mxu0 0
  %1370 = vmatprep.subr.bf16.mxu0 0
  %1371 = vmatpush1.bf16.msra.mxu0 0
  %1372 = vmatprep.subr.bf16.mxu0 0
  %1373 = vmatpush1.bf16.msra.mxu0 0
  %1374 = vmatprep.subr.bf16.mxu0 0
  %1375 = vmatpush1.bf16.msra.mxu0 0
  %1376 = vmatprep.subr.bf16.mxu0 0
  %1377 = vmatpush1.bf16.msra.mxu0 0
  %1378 = vmatprep.subr.bf16.mxu0 0
  %1379 = vmatpush1.bf16.msra.mxu0 0
  %1380 = vmatprep.subr.bf16.mxu0 0
  %1381 = vmatpush1.bf16.msra.mxu0 0
  %1382 = vmatprep.subr.bf16.mxu0 0
  %1383 = vmatpush1.bf16.msra.mxu0 0
  %1384 = vmatprep.subr.bf16.mxu0 0
  %1385 = vmatpush1.bf16.msra.mxu0 0
  %1386 = vmatprep.subr.bf16.mxu0 0
  %1387 = vmatpush1.bf16.msra.mxu0 0
  %1388 = vmatprep.subr.bf16.mxu0 0
  %1389 = vmatpush1.bf16.msra.mxu0 0
  %1390 = vmatprep.subr.bf16.mxu0 0
  %1391 = vmatpush1.bf16.msra.mxu0 0
  %1392 = vmatprep.mubr.bf16.mxu0 0
  %1393 = vmatmul.mubr.bf16.gmra.mrb[0].mxu0 %v1358
  %v1394 = vpop.f32.mrb[0].mxu0
  %v1395 = vadd.f32 %v1330, %v1394
  %v1396 = vpop.f32.mrb[0].mxu0
  %v1397 = vpop.f32.mrb[0].mxu0
  %v1398 = vadd.f32 %v1330, %v1397
  %v1399 = vpop.f32.mrb[0].mxu0
  %1400 = vdwg.mxu0
  %v1401 = vmax.f32 %v1395, 0.0
  %v1402 = vmax.f32 %v1398, 0.0
  %v1403 = vld [vmem:[%s14] sm:$0x1]
  %v1405 = vlaneseq
  %v1406 = vshrl.u32 %v1405, 7
  %v1407 = vsub.s32 0, %v1406
  %v1408 = vrot.slane %v1403, %v1407
  %v1410 = vmul.f32 %v1401, %v1408
  %v1411 = vmul.f32 %v1402, %v1408
  %v1412 = vsel %vm416, %v1410, 0.0
  %1413 = vadd.xlane.f32.xlu0 %v1412
  %v1414 = vpop.xlane.xlu0 %1413
  %v1415 = vsel %vm416, %v1411, 0.0
  %1416 = vadd.xlane.f32.xlu0 %v1415
  %v1417 = vpop.xlane.xlu0 %1416
  %v1418 = vld [vmem:[#allocation2] sm:$0x1]
  %v1420 = vlaneseq
  %v1421 = vshrl.u32 %v1420, 7
  %v1422 = vsub.s32 0, %v1421
  %v1423 = vrot.slane %v1418, %v1422
  %v1425 = vadd.f32 %v1414, %v1423
  %v1426 = vadd.f32 %v1417, %v1423
  %vm1427 = vcmask 7168
  %1428 = vst.msk [vmem:[%s16] sm:$0xff] %vm1427, %v1425
  %1429 = vst.msk [vmem:[%s16 + $0x8] sm:$0xff] %vm1427, %v1426
  // Predicated region
  $region66: #{value_network_forward.1} parent=0 // pred_check
    _
  $region67: #{value_network_forward.1} parent=0 // pred_check_branch
    %1431 = sbr.rel (0) target = $region69
  $region68: #{value_network_forward.1} parent=0 // pred_region
    _
  $region69: #{value_network_forward.1} parent=0 // pred_fallthru
    _
  // Predicated region
  $region70: #{value_network_forward.1} parent=0 // pred_check
    _
  $region71: #{value_network_forward.1} parent=0 // pred_check_branch
    %1433 = sbr.rel (0) target = $region73
  $region72: #{value_network_forward.1} parent=0 // pred_region
    _
  $region73: #{value_network_forward.1} parent=0 // pred_fallthru
    _

</llo_original>
